<compile_context>
chip_gen: v5e
topology: v5e:2x2
jax: 0.10.0
libtpu: 0.0.40
codegen_flags: <defaults>
</compile_context>

<pallas_src>
import functools

import jax
import jax.numpy as jnp
from jax.experimental import pallas as pl
from jax.experimental.pallas import tpu as pltpu


# ------------------------------ kernel helpers ------------------------------ #

def _linear(x3, w, b):
    # x3: (B, L, Cin), w: (Cout, Cin) [PyTorch layout], b: (1, Cout)
    B, L, Cin = x3.shape
    x2 = x3.reshape(B * L, Cin)            # L % 8 == 0 -> tile-aligned (free)
    y2 = jax.lax.dot_general(x2, w, (((1,), (1,)), ((), ())),
                             preferred_element_type=jnp.float32)
    return y2.reshape(B, L, w.shape[0]) + b[:, None, :]


# ------------------------------- fused kernel ------------------------------- #

def _fused_kernel(x_ref, *rest, K, dilations, max_pad, last_style):
    """All DepthwiseNet levels in one kernel; activations never leave VMEM.

    rest = (weight refs for all levels ..., o_ref, pad_scratch_ref)
    """
    pad_ref = rest[-1]            # VMEM scratch (B, max_pad + L, C): causal pad
    o_ref = rest[-2]
    w = rest[:-2]
    num_levels = len(dilations)
    B, L, C = x_ref.shape

    # Zero the causal-pad head region once.  Every level places its live
    # activation at rows [max_pad, max_pad + L), so rows [0, max_pad) stay zero
    # for every level's (smaller or equal) dilation.
    if max_pad > 0:
        pad_ref[:, :max_pad, :] = jnp.zeros((B, max_pad, C), jnp.float32)

    x = x_ref[...]                # (B, L, C) current activation (VMEM-resident)
    wi = 0
    for lvl in range(num_levels):
        d = dilations[lvl]
        is_last = last_style[lvl]
        conv_w = w[wi][...]       # (K, C)  depthwise taps (bias folded away)
        in_w = w[wi + 1][...]     # (3C, C) attention in_proj weight
        in_b = w[wi + 2][...]     # (1, 3C) in_proj bias + conv bias (host-folded)
        comb_w = w[wi + 3][...]   # (C, C)  = lin_w @ out_proj_w   (host-folded)
        comb_b = w[wi + 4][...]   # (1, C)  = out_proj_b @ lin_w^T + lin_b
        if is_last:
            lout_w = w[wi + 5][...]   # (C, C) linear_out
            lout_b = w[wi + 6][...]   # (1, C)
            wi += 7
        else:
            alpha = w[wi + 5][...]    # (1, C) per-channel PReLU slope
            wi += 6

        # ---- causal depthwise conv (dilation d) + fused chomp, length L ----
        # (conv bias folded into in_b on host: conv output only feeds qkv)
        if K > 1:
            pad_ref[:, max_pad:, :] = x           # data region after the zeros
        y = conv_w[None, K - 1:K, :] * x          # tap K-1: zero shift -> use x
        for j in range(K - 1):                    # static tap loop
            s = (K - 1 - j) * d                   # causal shift of tap j
            xs = pad_ref[:, max_pad - s:max_pad - s + L, :]
            y = y + conv_w[None, j:j + 1, :] * xs

        # ---- MultiheadAttention, heads == C, head_dim == 1, seq axis == B ----
        qkv = _linear(y, in_w, in_b)              # (B, L, 3C)
        q = qkv[..., 0 * C:1 * C]
        k = qkv[..., 1 * C:2 * C]
        v = qkv[..., 2 * C:3 * C]
        # head_dim == 1 => scale == 1; scores[b, b', l, c] = q[b,l,c] * k[b',l,c]
        scores = q[:, None, :, :] * k[None, :, :, :]          # (B, B, L, C)
        scores = scores - jnp.max(scores, axis=1, keepdims=True)
        e = jnp.exp(scores)
        # reduce over the key axis first, normalise once (fewer VPU multiplies)
        num = jnp.sum(e * v[None, :, :, :], axis=1)           # (B, L, C)
        den = jnp.sum(e, axis=1)                               # (B, L, C)
        attn = num * pl.reciprocal(den, approx=True)           # EUP slot

        # ---- folded out_proj + nn.Linear (single dot) ----
        a = _linear(attn, comb_w, comb_b)

        if is_last:
            x = _linear(a + x, lout_w, lout_b)    # residual + linear_out
        else:
            x = jnp.where(a > 0, a, alpha[:, None, :] * a)    # per-channel PReLU

    o_ref[...] = x


# ------------------------- parameters & forward pass ------------------------ #

def init_depthwise_net_params(key, num_inputs, num_levels, kernel_size=2,
                              dilation_c=2):
    """Deterministic synthetic init (conv/linear weights ~ N(0, 0.1) like
    init_weights(); attention in_proj/out_proj biases zero like PyTorch)."""
    C, K = num_inputs, kernel_size
    params = []
    for l in range(num_levels):
        ks = jax.random.split(jax.random.fold_in(key, l), 8)
        # PyTorch: level 0 is always FirstBlock; only a non-zero final level is
        # a LastBlock (residual + linear_out).
        last_style = (l == num_levels - 1) and (l != 0)
        p = {
            "conv_w": 0.1 * jax.random.normal(ks[0], (K, C), jnp.float32),
            "conv_b": 0.1 * jax.random.normal(ks[1], (1, C), jnp.float32),
            "in_w":   0.1 * jax.random.normal(ks[2], (3 * C, C), jnp.float32),
            "in_b":   jnp.zeros((1, 3 * C), jnp.float32),
            "outp_w": 0.1 * jax.random.normal(ks[3], (C, C), jnp.float32),
            "outp_b": jnp.zeros((1, C), jnp.float32),
            "lin_w":  0.1 * jax.random.normal(ks[4], (C, C), jnp.float32),
            "lin_b":  0.1 * jax.random.normal(ks[5], (1, C), jnp.float32),
            "dilation": dilation_c ** l,
        }
        if last_style:
            p["lout_w"] = 0.1 * jax.random.normal(ks[6], (C, C), jnp.float32)
            p["lout_b"] = 0.1 * jax.random.normal(ks[7], (1, C), jnp.float32)
        else:
            p["alpha"] = jnp.full((1, C), 0.25, jnp.float32)   # PReLU init
        params.append(p)
    return params


def depthwise_net_forward(params, x_ncl, kernel_size=2):
    """x_ncl: (B, C, L) exactly like the PyTorch module; returns (B, C, L)."""
    B, C, L = x_ncl.shape
    K = kernel_size
    dilations = tuple(int(p["dilation"]) for p in params)
    last_style = tuple("lout_w" in p for p in params)
    max_pad = (K - 1) * max(dilations)

    x_nlc = jnp.transpose(x_ncl, (0, 2, 1)).astype(jnp.float32)   # NCL -> NLC

    # Host-side algebraic folds:
    #   1) conv output only feeds the qkv projection, so the conv bias folds
    #      into the in_proj bias:  in_b_eff = in_b + conv_b @ in_w^T
    #   2) attention out_proj followed by nn.Linear:
    #      linear(out_proj(a)) = a @ (lin_w @ outp_w)^T + (outp_b @ lin_w^T + lin_b)
    flat_w = []
    for p in params:
        in_b_eff = p["in_b"] + p["conv_b"] @ p["in_w"].T
        comb_w = p["lin_w"] @ p["outp_w"]
        comb_b = p["outp_b"] @ p["lin_w"].T + p["lin_b"]
        flat_w += [p["conv_w"], p["in_w"], in_b_eff, comb_w, comb_b]
        if "lout_w" in p:
            flat_w += [p["lout_w"], p["lout_b"]]
        else:
            flat_w += [p["alpha"]]

    kernel = functools.partial(_fused_kernel, K=K, dilations=dilations,
                               max_pad=max_pad, last_style=last_style)
    out_nlc = pl.pallas_call(
        kernel,
        out_shape=jax.ShapeDtypeStruct((B, L, C), jnp.float32),
        in_specs=[pl.BlockSpec(memory_space=pltpu.MemorySpace.VMEM)]
        * (1 + len(flat_w)),
        out_specs=pl.BlockSpec(memory_space=pltpu.MemorySpace.VMEM),
        scratch_shapes=[pltpu.VMEM((B, max_pad + L, C), jnp.float32)],
        compiler_params=pltpu.CompilerParams(vmem_limit_bytes=32 * 1024 * 1024),
    )(x_nlc, *flat_w)
    return jnp.transpose(out_nlc, (0, 2, 1))                     # NLC -> NCL


if __name__ == "__main__":
    B, C, L = 4, 8, 16          # batch, channels (=num_inputs), sequence length
    num_levels = 3              # FirstBlock, TemporalBlock, LastBlock
    kernel_size = 2

    key = jax.random.PRNGKey(0)
    kx, kp = jax.random.split(key)
    x = jax.random.normal(kx, (B, C, L), dtype=jnp.float32)

    params = init_depthwise_net_params(kp, num_inputs=C, num_levels=num_levels,
                                       kernel_size=kernel_size, dilation_c=2)
    out = depthwise_net_forward(params, x, kernel_size=kernel_size)
    out = jax.block_until_ready(out)

    assert out.shape == (B, C, L), out.shape
    assert bool(jnp.all(jnp.isfinite(out)))
    print("KERNEL_OK")
</pallas_src>

<mosaic_0001>
module attributes {stable_mosaic.version = 11 : i64} {
  func.func @_fused_kernel(%arg0: memref<4x16x8xf32, #tpu.memory_space<vmem>>, %arg1: memref<2x8xf32, #tpu.memory_space<vmem>>, %arg2: memref<24x8xf32, #tpu.memory_space<vmem>>, %arg3: memref<1x24xf32, #tpu.memory_space<vmem>>, %arg4: memref<8x8xf32, #tpu.memory_space<vmem>>, %arg5: memref<1x8xf32, #tpu.memory_space<vmem>>, %arg6: memref<1x8xf32, #tpu.memory_space<vmem>>, %arg7: memref<2x8xf32, #tpu.memory_space<vmem>>, %arg8: memref<24x8xf32, #tpu.memory_space<vmem>>, %arg9: memref<1x24xf32, #tpu.memory_space<vmem>>, %arg10: memref<8x8xf32, #tpu.memory_space<vmem>>, %arg11: memref<1x8xf32, #tpu.memory_space<vmem>>, %arg12: memref<1x8xf32, #tpu.memory_space<vmem>>, %arg13: memref<2x8xf32, #tpu.memory_space<vmem>>, %arg14: memref<24x8xf32, #tpu.memory_space<vmem>>, %arg15: memref<1x24xf32, #tpu.memory_space<vmem>>, %arg16: memref<8x8xf32, #tpu.memory_space<vmem>>, %arg17: memref<1x8xf32, #tpu.memory_space<vmem>>, %arg18: memref<8x8xf32, #tpu.memory_space<vmem>>, %arg19: memref<1x8xf32, #tpu.memory_space<vmem>>, %arg20: memref<4x16x8xf32, #tpu.memory_space<vmem>>, %arg21: memref<4x20x8xf32, #tpu.memory_space<vmem>>) attributes {dimension_semantics = [], scalar_prefetch = 0 : i64, scratch_operands = 1 : i64, tpu.core_type = #tpu.core_type<tc>} {
    %cst = arith.constant 0.000000e+00 : f32
    %0 = vector.broadcast %cst : f32 to vector<4x4x8xf32>
    %c0 = arith.constant 0 : index
    %c0_0 = arith.constant 0 : index
    %c0_1 = arith.constant 0 : index
    %1 = vector.load %arg21[%c0, %c0_0, %c0_1] : memref<4x20x8xf32, #tpu.memory_space<vmem>>, vector<4x4x8xf32>
    tpu.vector_store %arg21[%c0, %c0_0, %c0_1], %0 {strides = array<i32>} : memref<4x20x8xf32, #tpu.memory_space<vmem>>, vector<4x4x8xf32>,
    %c0_2 = arith.constant 0 : index
    %c0_3 = arith.constant 0 : index
    %c0_4 = arith.constant 0 : index
    %2 = vector.load %arg0[%c0_2, %c0_3, %c0_4] : memref<4x16x8xf32, #tpu.memory_space<vmem>>, vector<4x16x8xf32>
    %c0_5 = arith.constant 0 : index
    %c0_6 = arith.constant 0 : index
    %3 = vector.load %arg1[%c0_5, %c0_6] : memref<2x8xf32, #tpu.memory_space<vmem>>, vector<2x8xf32>
    %c0_7 = arith.constant 0 : index
    %c0_8 = arith.constant 0 : index
    %4 = vector.load %arg2[%c0_7, %c0_8] : memref<24x8xf32, #tpu.memory_space<vmem>>, vector<24x8xf32>
    %c0_9 = arith.constant 0 : index
    %c0_10 = arith.constant 0 : index
    %5 = vector.load %arg3[%c0_9, %c0_10] : memref<1x24xf32, #tpu.memory_space<vmem>>, vector<1x24xf32>
    %c0_11 = arith.constant 0 : index
    %c0_12 = arith.constant 0 : index
    %6 = vector.load %arg4[%c0_11, %c0_12] : memref<8x8xf32, #tpu.memory_space<vmem>>, vector<8x8xf32>
    %c0_13 = arith.constant 0 : index
    %c0_14 = arith.constant 0 : index
    %7 = vector.load %arg5[%c0_13, %c0_14] : memref<1x8xf32, #tpu.memory_space<vmem>>, vector<1x8xf32>
    %c0_15 = arith.constant 0 : index
    %c0_16 = arith.constant 0 : index
    %8 = vector.load %arg6[%c0_15, %c0_16] : memref<1x8xf32, #tpu.memory_space<vmem>>, vector<1x8xf32>
    %c0_17 = arith.constant 0 : index
    %c4 = arith.constant 4 : index
    %c0_18 = arith.constant 0 : index
    %9 = vector.load %arg21[%c0_17, %c4, %c0_18] : memref<4x20x8xf32, #tpu.memory_space<vmem>>, vector<4x16x8xf32>
    tpu.vector_store %arg21[%c0_17, %c4, %c0_18], %2 {strides = array<i32>} : memref<4x20x8xf32, #tpu.memory_space<vmem>>, vector<4x16x8xf32>,
    %10 = vector.extract_strided_slice %3 {offsets = [1, 0], sizes = [1, 8], strides = [1, 1]} : vector<2x8xf32> to vector<1x8xf32>
    %11 = vector.shape_cast %10 : vector<1x8xf32> to vector<1x1x8xf32>
    %12 = vector.broadcast %11 : vector<1x1x8xf32> to vector<4x16x8xf32>
    %13 = arith.mulf %12, %2 : vector<4x16x8xf32>
    %c0_19 = arith.constant 0 : index
    %c3 = arith.constant 3 : index
    %c0_20 = arith.constant 0 : index
    %14 = vector.load %arg21[%c0_19, %c3, %c0_20] : memref<4x20x8xf32, #tpu.memory_space<vmem>>, vector<4x16x8xf32>
    %15 = vector.extract_strided_slice %3 {offsets = [0, 0], sizes = [1, 8], strides = [1, 1]} : vector<2x8xf32> to vector<1x8xf32>
    %16 = vector.shape_cast %15 : vector<1x8xf32> to vector<1x1x8xf32>
    %17 = vector.broadcast %16 : vector<1x1x8xf32> to vector<4x16x8xf32>
    %18 = arith.mulf %17, %14 : vector<4x16x8xf32>
    %19 = arith.addf %13, %18 : vector<4x16x8xf32>
    %20 = vector.shape_cast %19 : vector<4x16x8xf32> to vector<64x8xf32>
    %cst_21 = arith.constant dense<0.000000e+00> : vector<64x24xf32>
    %21 = tpu.matmul %20, %4, %cst_21 {dimension_numbers = #tpu.dot_dimension_numbers<[1], [1], [0], [0], [0, 0, 1, 0], [], []>} : vector<64x8xf32>, vector<24x8xf32>, vector<64x24xf32> -> vector<64x24xf32>
    %22 = vector.shape_cast %21 : vector<64x24xf32> to vector<4x16x24xf32>
    %23 = vector.shape_cast %5 : vector<1x24xf32> to vector<1x1x24xf32>
    %24 = vector.broadcast %23 : vector<1x1x24xf32> to vector<4x16x24xf32>
    %25 = arith.addf %22, %24 : vector<4x16x24xf32>
    %26 = vector.extract_strided_slice %25 {offsets = [0, 0, 0], sizes = [4, 16, 8], strides = [1, 1, 1]} : vector<4x16x24xf32> to vector<4x16x8xf32>
    %27 = vector.extract_strided_slice %25 {offsets = [0, 0, 8], sizes = [4, 16, 8], strides = [1, 1, 1]} : vector<4x16x24xf32> to vector<4x16x8xf32>
    %28 = vector.extract_strided_slice %25 {offsets = [0, 0, 16], sizes = [4, 16, 8], strides = [1, 1, 1]} : vector<4x16x24xf32> to vector<4x16x8xf32>
    %29 = vector.shape_cast %26 : vector<4x16x8xf32> to vector<4x1x16x8xf32>
    %30 = vector.shape_cast %27 : vector<4x16x8xf32> to vector<1x4x16x8xf32>
    %31 = vector.broadcast %29 : vector<4x1x16x8xf32> to vector<4x4x16x8xf32>
    %32 = vector.broadcast %30 : vector<1x4x16x8xf32> to vector<4x4x16x8xf32>
    %33 = arith.mulf %31, %32 : vector<4x4x16x8xf32>
    %cst_22 = arith.constant dense<0xFF800000> : vector<4x16x8xf32>
    %34 = vector.multi_reduction <maximumf>, %33, %cst_22 [1] : vector<4x4x16x8xf32> to vector<4x16x8xf32>
    %35 = vector.shape_cast %34 : vector<4x16x8xf32> to vector<4x1x16x8xf32>
    %36 = vector.broadcast %35 : vector<4x1x16x8xf32> to vector<4x4x16x8xf32>
    %37 = arith.subf %33, %36 : vector<4x4x16x8xf32>
    %38 = math.exp %37 : vector<4x4x16x8xf32>
    %39 = vector.shape_cast %28 : vector<4x16x8xf32> to vector<1x4x16x8xf32>
    %40 = vector.broadcast %39 : vector<1x4x16x8xf32> to vector<4x4x16x8xf32>
    %41 = arith.mulf %38, %40 : vector<4x4x16x8xf32>
    %cst_23 = arith.constant dense<0.000000e+00> : vector<4x16x8xf32>
    %42 = vector.multi_reduction <add>, %41, %cst_23 [1] : vector<4x4x16x8xf32> to vector<4x16x8xf32>
    %cst_24 = arith.constant dense<0.000000e+00> : vector<4x16x8xf32>
    %43 = vector.multi_reduction <add>, %38, %cst_24 [1] : vector<4x4x16x8xf32> to vector<4x16x8xf32>
    %44 = tpu.reciprocal %43 {approx = true} : vector<4x16x8xf32> -> vector<4x16x8xf32>
    %45 = arith.mulf %42, %44 : vector<4x16x8xf32>
    %46 = vector.shape_cast %45 : vector<4x16x8xf32> to vector<64x8xf32>
    %cst_25 = arith.constant dense<0.000000e+00> : vector<64x8xf32>
    %47 = tpu.matmul %46, %6, %cst_25 {dimension_numbers = #tpu.dot_dimension_numbers<[1], [1], [0], [0], [0, 0, 1, 0], [], []>} : vector<64x8xf32>, vector<8x8xf32>, vector<64x8xf32> -> vector<64x8xf32>
    %48 = vector.shape_cast %47 : vector<64x8xf32> to vector<4x16x8xf32>
    %49 = vector.shape_cast %7 : vector<1x8xf32> to vector<1x1x8xf32>
    %50 = vector.broadcast %49 : vector<1x1x8xf32> to vector<4x16x8xf32>
    %51 = arith.addf %48, %50 : vector<4x16x8xf32>
    %cst_26 = arith.constant 0.000000e+00 : f32
    %52 = vector.broadcast %cst_26 : f32 to vector<4x16x8xf32>
    %53 = arith.cmpf ogt, %51, %52 : vector<4x16x8xf32>
    %54 = vector.shape_cast %8 : vector<1x8xf32> to vector<1x1x8xf32>
    %55 = vector.broadcast %54 : vector<1x1x8xf32> to vector<4x16x8xf32>
    %56 = arith.mulf %55, %51 : vector<4x16x8xf32>
    %57 = arith.select %53, %51, %56 : vector<4x16x8xi1>, vector<4x16x8xf32>
    %c0_27 = arith.constant 0 : index
    %c0_28 = arith.constant 0 : index
    %58 = vector.load %arg7[%c0_27, %c0_28] : memref<2x8xf32, #tpu.memory_space<vmem>>, vector<2x8xf32>
    %c0_29 = arith.constant 0 : index
    %c0_30 = arith.constant 0 : index
    %59 = vector.load %arg8[%c0_29, %c0_30] : memref<24x8xf32, #tpu.memory_space<vmem>>, vector<24x8xf32>
    %c0_31 = arith.constant 0 : index
    %c0_32 = arith.constant 0 : index
    %60 = vector.load %arg9[%c0_31, %c0_32] : memref<1x24xf32, #tpu.memory_space<vmem>>, vector<1x24xf32>
    %c0_33 = arith.constant 0 : index
    %c0_34 = arith.constant 0 : index
    %61 = vector.load %arg10[%c0_33, %c0_34] : memref<8x8xf32, #tpu.memory_space<vmem>>, vector<8x8xf32>
    %c0_35 = arith.constant 0 : index
    %c0_36 = arith.constant 0 : index
    %62 = vector.load %arg11[%c0_35, %c0_36] : memref<1x8xf32, #tpu.memory_space<vmem>>, vector<1x8xf32>
    %c0_37 = arith.constant 0 : index
    %c0_38 = arith.constant 0 : index
    %63 = vector.load %arg12[%c0_37, %c0_38] : memref<1x8xf32, #tpu.memory_space<vmem>>, vector<1x8xf32>
    %c0_39 = arith.constant 0 : index
    %c4_40 = arith.constant 4 : index
    %c0_41 = arith.constant 0 : index
    %64 = vector.load %arg21[%c0_39, %c4_40, %c0_41] : memref<4x20x8xf32, #tpu.memory_space<vmem>>, vector<4x16x8xf32>
    tpu.vector_store %arg21[%c0_39, %c4_40, %c0_41], %57 {strides = array<i32>} : memref<4x20x8xf32, #tpu.memory_space<vmem>>, vector<4x16x8xf32>,
    %65 = vector.extract_strided_slice %58 {offsets = [1, 0], sizes = [1, 8], strides = [1, 1]} : vector<2x8xf32> to vector<1x8xf32>
    %66 = vector.shape_cast %65 : vector<1x8xf32> to vector<1x1x8xf32>
    %67 = vector.broadcast %66 : vector<1x1x8xf32> to vector<4x16x8xf32>
    %68 = arith.mulf %67, %57 : vector<4x16x8xf32>
    %c0_42 = arith.constant 0 : index
    %c2 = arith.constant 2 : index
    %c0_43 = arith.constant 0 : index
    %69 = vector.load %arg21[%c0_42, %c2, %c0_43] : memref<4x20x8xf32, #tpu.memory_space<vmem>>, vector<4x16x8xf32>
    %70 = vector.extract_strided_slice %58 {offsets = [0, 0], sizes = [1, 8], strides = [1, 1]} : vector<2x8xf32> to vector<1x8xf32>
    %71 = vector.shape_cast %70 : vector<1x8xf32> to vector<1x1x8xf32>
    %72 = vector.broadcast %71 : vector<1x1x8xf32> to vector<4x16x8xf32>
    %73 = arith.mulf %72, %69 : vector<4x16x8xf32>
    %74 = arith.addf %68, %73 : vector<4x16x8xf32>
    %75 = vector.shape_cast %74 : vector<4x16x8xf32> to vector<64x8xf32>
    %cst_44 = arith.constant dense<0.000000e+00> : vector<64x24xf32>
    %76 = tpu.matmul %75, %59, %cst_44 {dimension_numbers = #tpu.dot_dimension_numbers<[1], [1], [0], [0], [0, 0, 1, 0], [], []>} : vector<64x8xf32>, vector<24x8xf32>, vector<64x24xf32> -> vector<64x24xf32>
    %77 = vector.shape_cast %76 : vector<64x24xf32> to vector<4x16x24xf32>
    %78 = vector.shape_cast %60 : vector<1x24xf32> to vector<1x1x24xf32>
    %79 = vector.broadcast %78 : vector<1x1x24xf32> to vector<4x16x24xf32>
    %80 = arith.addf %77, %79 : vector<4x16x24xf32>
    %81 = vector.extract_strided_slice %80 {offsets = [0, 0, 0], sizes = [4, 16, 8], strides = [1, 1, 1]} : vector<4x16x24xf32> to vector<4x16x8xf32>
    %82 = vector.extract_strided_slice %80 {offsets = [0, 0, 8], sizes = [4, 16, 8], strides = [1, 1, 1]} : vector<4x16x24xf32> to vector<4x16x8xf32>
    %83 = vector.extract_strided_slice %80 {offsets = [0, 0, 16], sizes = [4, 16, 8], strides = [1, 1, 1]} : vector<4x16x24xf32> to vector<4x16x8xf32>
    %84 = vector.shape_cast %81 : vector<4x16x8xf32> to vector<4x1x16x8xf32>
    %85 = vector.shape_cast %82 : vector<4x16x8xf32> to vector<1x4x16x8xf32>
    %86 = vector.broadcast %84 : vector<4x1x16x8xf32> to vector<4x4x16x8xf32>
    %87 = vector.broadcast %85 : vector<1x4x16x8xf32> to vector<4x4x16x8xf32>
    %88 = arith.mulf %86, %87 : vector<4x4x16x8xf32>
    %cst_45 = arith.constant dense<0xFF800000> : vector<4x16x8xf32>
    %89 = vector.multi_reduction <maximumf>, %88, %cst_45 [1] : vector<4x4x16x8xf32> to vector<4x16x8xf32>
    %90 = vector.shape_cast %89 : vector<4x16x8xf32> to vector<4x1x16x8xf32>
    %91 = vector.broadcast %90 : vector<4x1x16x8xf32> to vector<4x4x16x8xf32>
    %92 = arith.subf %88, %91 : vector<4x4x16x8xf32>
    %93 = math.exp %92 : vector<4x4x16x8xf32>
    %94 = vector.shape_cast %83 : vector<4x16x8xf32> to vector<1x4x16x8xf32>
    %95 = vector.broadcast %94 : vector<1x4x16x8xf32> to vector<4x4x16x8xf32>
    %96 = arith.mulf %93, %95 : vector<4x4x16x8xf32>
    %cst_46 = arith.constant dense<0.000000e+00> : vector<4x16x8xf32>
    %97 = vector.multi_reduction <add>, %96, %cst_46 [1] : vector<4x4x16x8xf32> to vector<4x16x8xf32>
    %cst_47 = arith.constant dense<0.000000e+00> : vector<4x16x8xf32>
    %98 = vector.multi_reduction <add>, %93, %cst_47 [1] : vector<4x4x16x8xf32> to vector<4x16x8xf32>
    %99 = tpu.reciprocal %98 {approx = true} : vector<4x16x8xf32> -> vector<4x16x8xf32>
    %100 = arith.mulf %97, %99 : vector<4x16x8xf32>
    %101 = vector.shape_cast %100 : vector<4x16x8xf32> to vector<64x8xf32>
    %cst_48 = arith.constant dense<0.000000e+00> : vector<64x8xf32>
    %102 = tpu.matmul %101, %61, %cst_48 {dimension_numbers = #tpu.dot_dimension_numbers<[1], [1], [0], [0], [0, 0, 1, 0], [], []>} : vector<64x8xf32>, vector<8x8xf32>, vector<64x8xf32> -> vector<64x8xf32>
    %103 = vector.shape_cast %102 : vector<64x8xf32> to vector<4x16x8xf32>
    %104 = vector.shape_cast %62 : vector<1x8xf32> to vector<1x1x8xf32>
    %105 = vector.broadcast %104 : vector<1x1x8xf32> to vector<4x16x8xf32>
    %106 = arith.addf %103, %105 : vector<4x16x8xf32>
    %cst_49 = arith.constant 0.000000e+00 : f32
    %107 = vector.broadcast %cst_49 : f32 to vector<4x16x8xf32>
    %108 = arith.cmpf ogt, %106, %107 : vector<4x16x8xf32>
    %109 = vector.shape_cast %63 : vector<1x8xf32> to vector<1x1x8xf32>
    %110 = vector.broadcast %109 : vector<1x1x8xf32> to vector<4x16x8xf32>
    %111 = arith.mulf %110, %106 : vector<4x16x8xf32>
    %112 = arith.select %108, %106, %111 : vector<4x16x8xi1>, vector<4x16x8xf32>
    %c0_50 = arith.constant 0 : index
    %c0_51 = arith.constant 0 : index
    %113 = vector.load %arg13[%c0_50, %c0_51] : memref<2x8xf32, #tpu.memory_space<vmem>>, vector<2x8xf32>
    %c0_52 = arith.constant 0 : index
    %c0_53 = arith.constant 0 : index
    %114 = vector.load %arg14[%c0_52, %c0_53] : memref<24x8xf32, #tpu.memory_space<vmem>>, vector<24x8xf32>
    %c0_54 = arith.constant 0 : index
    %c0_55 = arith.constant 0 : index
    %115 = vector.load %arg15[%c0_54, %c0_55] : memref<1x24xf32, #tpu.memory_space<vmem>>, vector<1x24xf32>
    %c0_56 = arith.constant 0 : index
    %c0_57 = arith.constant 0 : index
    %116 = vector.load %arg16[%c0_56, %c0_57] : memref<8x8xf32, #tpu.memory_space<vmem>>, vector<8x8xf32>
    %c0_58 = arith.constant 0 : index
    %c0_59 = arith.constant 0 : index
    %117 = vector.load %arg17[%c0_58, %c0_59] : memref<1x8xf32, #tpu.memory_space<vmem>>, vector<1x8xf32>
    %c0_60 = arith.constant 0 : index
    %c0_61 = arith.constant 0 : index
    %118 = vector.load %arg18[%c0_60, %c0_61] : memref<8x8xf32, #tpu.memory_space<vmem>>, vector<8x8xf32>
    %c0_62 = arith.constant 0 : index
    %c0_63 = arith.constant 0 : index
    %119 = vector.load %arg19[%c0_62, %c0_63] : memref<1x8xf32, #tpu.memory_space<vmem>>, vector<1x8xf32>
    %c0_64 = arith.constant 0 : index
    %c4_65 = arith.constant 4 : index
    %c0_66 = arith.constant 0 : index
    %120 = vector.load %arg21[%c0_64, %c4_65, %c0_66] : memref<4x20x8xf32, #tpu.memory_space<vmem>>, vector<4x16x8xf32>
    tpu.vector_store %arg21[%c0_64, %c4_65, %c0_66], %112 {strides = array<i32>} : memref<4x20x8xf32, #tpu.memory_space<vmem>>, vector<4x16x8xf32>,
    %121 = vector.extract_strided_slice %113 {offsets = [1, 0], sizes = [1, 8], strides = [1, 1]} : vector<2x8xf32> to vector<1x8xf32>
    %122 = vector.shape_cast %121 : vector<1x8xf32> to vector<1x1x8xf32>
    %123 = vector.broadcast %122 : vector<1x1x8xf32> to vector<4x16x8xf32>
    %124 = arith.mulf %123, %112 : vector<4x16x8xf32>
    %c0_67 = arith.constant 0 : index
    %c0_68 = arith.constant 0 : index
    %c0_69 = arith.constant 0 : index
    %125 = vector.load %arg21[%c0_67, %c0_68, %c0_69] : memref<4x20x8xf32, #tpu.memory_space<vmem>>, vector<4x16x8xf32>
    %126 = vector.extract_strided_slice %113 {offsets = [0, 0], sizes = [1, 8], strides = [1, 1]} : vector<2x8xf32> to vector<1x8xf32>
    %127 = vector.shape_cast %126 : vector<1x8xf32> to vector<1x1x8xf32>
    %128 = vector.broadcast %127 : vector<1x1x8xf32> to vector<4x16x8xf32>
    %129 = arith.mulf %128, %125 : vector<4x16x8xf32>
    %130 = arith.addf %124, %129 : vector<4x16x8xf32>
    %131 = vector.shape_cast %130 : vector<4x16x8xf32> to vector<64x8xf32>
    %cst_70 = arith.constant dense<0.000000e+00> : vector<64x24xf32>
    %132 = tpu.matmul %131, %114, %cst_70 {dimension_numbers = #tpu.dot_dimension_numbers<[1], [1], [0], [0], [0, 0, 1, 0], [], []>} : vector<64x8xf32>, vector<24x8xf32>, vector<64x24xf32> -> vector<64x24xf32>
    %133 = vector.shape_cast %132 : vector<64x24xf32> to vector<4x16x24xf32>
    %134 = vector.shape_cast %115 : vector<1x24xf32> to vector<1x1x24xf32>
    %135 = vector.broadcast %134 : vector<1x1x24xf32> to vector<4x16x24xf32>
    %136 = arith.addf %133, %135 : vector<4x16x24xf32>
    %137 = vector.extract_strided_slice %136 {offsets = [0, 0, 0], sizes = [4, 16, 8], strides = [1, 1, 1]} : vector<4x16x24xf32> to vector<4x16x8xf32>
    %138 = vector.extract_strided_slice %136 {offsets = [0, 0, 8], sizes = [4, 16, 8], strides = [1, 1, 1]} : vector<4x16x24xf32> to vector<4x16x8xf32>
    %139 = vector.extract_strided_slice %136 {offsets = [0, 0, 16], sizes = [4, 16, 8], strides = [1, 1, 1]} : vector<4x16x24xf32> to vector<4x16x8xf32>
    %140 = vector.shape_cast %137 : vector<4x16x8xf32> to vector<4x1x16x8xf32>
    %141 = vector.shape_cast %138 : vector<4x16x8xf32> to vector<1x4x16x8xf32>
    %142 = vector.broadcast %140 : vector<4x1x16x8xf32> to vector<4x4x16x8xf32>
    %143 = vector.broadcast %141 : vector<1x4x16x8xf32> to vector<4x4x16x8xf32>
    %144 = arith.mulf %142, %143 : vector<4x4x16x8xf32>
    %cst_71 = arith.constant dense<0xFF800000> : vector<4x16x8xf32>
    %145 = vector.multi_reduction <maximumf>, %144, %cst_71 [1] : vector<4x4x16x8xf32> to vector<4x16x8xf32>
    %146 = vector.shape_cast %145 : vector<4x16x8xf32> to vector<4x1x16x8xf32>
    %147 = vector.broadcast %146 : vector<4x1x16x8xf32> to vector<4x4x16x8xf32>
    %148 = arith.subf %144, %147 : vector<4x4x16x8xf32>
    %149 = math.exp %148 : vector<4x4x16x8xf32>
    %150 = vector.shape_cast %139 : vector<4x16x8xf32> to vector<1x4x16x8xf32>
    %151 = vector.broadcast %150 : vector<1x4x16x8xf32> to vector<4x4x16x8xf32>
    %152 = arith.mulf %149, %151 : vector<4x4x16x8xf32>
    %cst_72 = arith.constant dense<0.000000e+00> : vector<4x16x8xf32>
    %153 = vector.multi_reduction <add>, %152, %cst_72 [1] : vector<4x4x16x8xf32> to vector<4x16x8xf32>
    %cst_73 = arith.constant dense<0.000000e+00> : vector<4x16x8xf32>
    %154 = vector.multi_reduction <add>, %149, %cst_73 [1] : vector<4x4x16x8xf32> to vector<4x16x8xf32>
    %155 = tpu.reciprocal %154 {approx = true} : vector<4x16x8xf32> -> vector<4x16x8xf32>
    %156 = arith.mulf %153, %155 : vector<4x16x8xf32>
    %157 = vector.shape_cast %156 : vector<4x16x8xf32> to vector<64x8xf32>
    %cst_74 = arith.constant dense<0.000000e+00> : vector<64x8xf32>
    %158 = tpu.matmul %157, %116, %cst_74 {dimension_numbers = #tpu.dot_dimension_numbers<[1], [1], [0], [0], [0, 0, 1, 0], [], []>} : vector<64x8xf32>, vector<8x8xf32>, vector<64x8xf32> -> vector<64x8xf32>
    %159 = vector.shape_cast %158 : vector<64x8xf32> to vector<4x16x8xf32>
    %160 = vector.shape_cast %117 : vector<1x8xf32> to vector<1x1x8xf32>
    %161 = vector.broadcast %160 : vector<1x1x8xf32> to vector<4x16x8xf32>
    %162 = arith.addf %159, %161 : vector<4x16x8xf32>
    %163 = arith.addf %162, %112 : vector<4x16x8xf32>
    %164 = vector.shape_cast %163 : vector<4x16x8xf32> to vector<64x8xf32>
    %cst_75 = arith.constant dense<0.000000e+00> : vector<64x8xf32>
    %165 = tpu.matmul %164, %118, %cst_75 {dimension_numbers = #tpu.dot_dimension_numbers<[1], [1], [0], [0], [0, 0, 1, 0], [], []>} : vector<64x8xf32>, vector<8x8xf32>, vector<64x8xf32> -> vector<64x8xf32>
    %166 = vector.shape_cast %165 : vector<64x8xf32> to vector<4x16x8xf32>
    %167 = vector.shape_cast %119 : vector<1x8xf32> to vector<1x1x8xf32>
    %168 = vector.broadcast %167 : vector<1x1x8xf32> to vector<4x16x8xf32>
    %169 = arith.addf %166, %168 : vector<4x16x8xf32>
    %c0_76 = arith.constant 0 : index
    %c0_77 = arith.constant 0 : index
    %c0_78 = arith.constant 0 : index
    %170 = vector.load %arg20[%c0_76, %c0_77, %c0_78] : memref<4x16x8xf32, #tpu.memory_space<vmem>>, vector<4x16x8xf32>
    tpu.vector_store %arg20[%c0_76, %c0_77, %c0_78], %169 {strides = array<i32>} : memref<4x16x8xf32, #tpu.memory_space<vmem>>, vector<4x16x8xf32>,
    return
  }
}

</mosaic_0001>

<llo_original>
// kernel: tpu_custom_call.1
$region0: #{tpu_custom_call.1}
  #allocation0 [shape = 'u32[]', space=smem, size = 0x4, offset = 0x4, fixed_abs, tag = 'smem constant byte address 0x4 - core index']
  #allocation1 [shape = 'u32[72,128]{1,0:T(1,128)}', space=vmem, size = 0x9000, scoped, tag = 'internal scratch']
  #allocation2 [shape = 'f32[4,20,8]{2,1,0:T(8,128)}', space=vmem, size = 0xc000, scoped, tag = 'scratch operand']
  %s0 = inlined_call_operand.vmem [shape: f32[4,16,8], index: 0, kind: input, shape index: {}]
  %s1 = inlined_call_operand.vmem [shape: f32[2,8], index: 1, kind: input, shape index: {}]
  %s2 = inlined_call_operand.vmem [shape: f32[24,8], index: 2, kind: input, shape index: {}]
  %s3 = inlined_call_operand.vmem [shape: f32[1,24], index: 3, kind: input, shape index: {}]
  %s4 = inlined_call_operand.vmem [shape: f32[8,8], index: 4, kind: input, shape index: {}]
  %s5 = inlined_call_operand.vmem [shape: f32[1,8], index: 5, kind: input, shape index: {}]
  %s6 = inlined_call_operand.vmem [shape: f32[1,8], index: 6, kind: input, shape index: {}]
  %s7 = inlined_call_operand.vmem [shape: f32[2,8], index: 7, kind: input, shape index: {}]
  %s8 = inlined_call_operand.vmem [shape: f32[24,8], index: 8, kind: input, shape index: {}]
  %s9 = inlined_call_operand.vmem [shape: f32[1,24], index: 9, kind: input, shape index: {}]
  %s10 = inlined_call_operand.vmem [shape: f32[8,8], index: 10, kind: input, shape index: {}]
  %s11 = inlined_call_operand.vmem [shape: f32[1,8], index: 11, kind: input, shape index: {}]
  %s12 = inlined_call_operand.vmem [shape: f32[1,8], index: 12, kind: input, shape index: {}]
  %s13 = inlined_call_operand.vmem [shape: f32[2,8], index: 13, kind: input, shape index: {}]
  %s14 = inlined_call_operand.vmem [shape: f32[24,8], index: 14, kind: input, shape index: {}]
  %s15 = inlined_call_operand.vmem [shape: f32[1,24], index: 15, kind: input, shape index: {}]
  %s16 = inlined_call_operand.vmem [shape: f32[8,8], index: 16, kind: input, shape index: {}]
  %s17 = inlined_call_operand.vmem [shape: f32[1,8], index: 17, kind: input, shape index: {}]
  %s18 = inlined_call_operand.vmem [shape: f32[8,8], index: 18, kind: input, shape index: {}]
  %s19 = inlined_call_operand.vmem [shape: f32[1,8], index: 19, kind: input, shape index: {}]
  %s20 = inlined_call_operand.vmem [shape: f32[4,16,8], index: 20, kind: output, shape index: {}]
  %s21 = sld [smem:[#allocation0]]
  $region90: #{tpu_custom_call.1} parent=0
    _
  %s23 = ssub.s32 1, %s21
  %s24 = scalar_select 0, %s23, %s21
  // Predicated region
  $region2: #{tpu_custom_call.1} parent=0 // pred_check
    _
  $region3: #{tpu_custom_call.1} parent=0 // pred_check_branch
    %26 = sbr.rel (0) target = $region5
  $region4: #{tpu_custom_call.1} parent=0 // pred_region
    _
  $region5: #{tpu_custom_call.1} parent=0 // pred_fallthru
    _
  // Predicated region
  $region6: #{tpu_custom_call.1} parent=0 // pred_check
    _
  $region7: #{tpu_custom_call.1} parent=0 // pred_check_branch
    %28 = sbr.rel (0) target = $region9
  $region8: #{tpu_custom_call.1} parent=0 // pred_region
    _
  $region9: #{tpu_custom_call.1} parent=0 // pred_fallthru
    _
  // Predicated region
  $region10: #{tpu_custom_call.1} parent=0 // pred_check
    _
  $region11: #{tpu_custom_call.1} parent=0 // pred_check_branch
    %30 = sbr.rel (0) target = $region13
  $region12: #{tpu_custom_call.1} parent=0 // pred_region
    _
  $region13: #{tpu_custom_call.1} parent=0 // pred_fallthru
    _
  // Predicated region
  $region14: #{tpu_custom_call.1} parent=0 // pred_check
    _
  $region15: #{tpu_custom_call.1} parent=0 // pred_check_branch
    %32 = sbr.rel (0) target = $region17
  $region16: #{tpu_custom_call.1} parent=0 // pred_region
    _
  $region17: #{tpu_custom_call.1} parent=0 // pred_fallthru
    _
  // Predicated region
  $region18: #{tpu_custom_call.1} parent=0 // pred_check
    _
  $region19: #{tpu_custom_call.1} parent=0 // pred_check_branch
    %34 = sbr.rel (0) target = $region21
  $region20: #{tpu_custom_call.1} parent=0 // pred_region
    _
  $region21: #{tpu_custom_call.1} parent=0 // pred_fallthru
    _
  // Predicated region
  $region22: #{tpu_custom_call.1} parent=0 // pred_check
    _
  $region23: #{tpu_custom_call.1} parent=0 // pred_check_branch
    %36 = sbr.rel (0) target = $region25
  $region24: #{tpu_custom_call.1} parent=0 // pred_region
    _
  $region25: #{tpu_custom_call.1} parent=0 // pred_fallthru
    _
  // Predicated region
  $region26: #{tpu_custom_call.1} parent=0 // pred_check
    _
  $region27: #{tpu_custom_call.1} parent=0 // pred_check_branch
    %38 = sbr.rel (0) target = $region29
  $region28: #{tpu_custom_call.1} parent=0 // pred_region
    _
  $region29: #{tpu_custom_call.1} parent=0 // pred_fallthru
    _
  // Predicated region
  $region30: #{tpu_custom_call.1} parent=0 // pred_check
    _
  $region31: #{tpu_custom_call.1} parent=0 // pred_check_branch
    %40 = sbr.rel (0) target = $region33
  $region32: #{tpu_custom_call.1} parent=0 // pred_region
    _
  $region33: #{tpu_custom_call.1} parent=0 // pred_fallthru
    _
  // Predicated region
  $region34: #{tpu_custom_call.1} parent=0 // pred_check
    _
  $region35: #{tpu_custom_call.1} parent=0 // pred_check_branch
    %42 = sbr.rel (0) target = $region37
  $region36: #{tpu_custom_call.1} parent=0 // pred_region
    _
  $region37: #{tpu_custom_call.1} parent=0 // pred_fallthru
    _
  // Predicated region
  $region38: #{tpu_custom_call.1} parent=0 // pred_check
    _
  $region39: #{tpu_custom_call.1} parent=0 // pred_check_branch
    %44 = sbr.rel (0) target = $region41
  $region40: #{tpu_custom_call.1} parent=0 // pred_region
    _
  $region41: #{tpu_custom_call.1} parent=0 // pred_fallthru
    _
  // Predicated region
  $region42: #{tpu_custom_call.1} parent=0 // pred_check
    _
  $region43: #{tpu_custom_call.1} parent=0 // pred_check_branch
    %46 = sbr.rel (0) target = $region45
  $region44: #{tpu_custom_call.1} parent=0 // pred_region
    _
  $region45: #{tpu_custom_call.1} parent=0 // pred_fallthru
    _
  // Predicated region
  $region46: #{tpu_custom_call.1} parent=0 // pred_check
    _
  $region47: #{tpu_custom_call.1} parent=0 // pred_check_branch
    %48 = sbr.rel (0) target = $region49
  $region48: #{tpu_custom_call.1} parent=0 // pred_region
    _
  $region49: #{tpu_custom_call.1} parent=0 // pred_fallthru
    _
  // Predicated region
  $region50: #{tpu_custom_call.1} parent=0 // pred_check
    _
  $region51: #{tpu_custom_call.1} parent=0 // pred_check_branch
    %50 = sbr.rel (0) target = $region53
  $region52: #{tpu_custom_call.1} parent=0 // pred_region
    _
  $region53: #{tpu_custom_call.1} parent=0 // pred_fallthru
    _
  // Predicated region
  $region54: #{tpu_custom_call.1} parent=0 // pred_check
    _
  $region55: #{tpu_custom_call.1} parent=0 // pred_check_branch
    %52 = sbr.rel (0) target = $region57
  $region56: #{tpu_custom_call.1} parent=0 // pred_region
    _
  $region57: #{tpu_custom_call.1} parent=0 // pred_fallthru
    _
  // Predicated region
  $region58: #{tpu_custom_call.1} parent=0 // pred_check
    _
  $region59: #{tpu_custom_call.1} parent=0 // pred_check_branch
    %54 = sbr.rel (0) target = $region61
  $region60: #{tpu_custom_call.1} parent=0 // pred_region
    _
  $region61: #{tpu_custom_call.1} parent=0 // pred_fallthru
    _
  // Predicated region
  $region62: #{tpu_custom_call.1} parent=0 // pred_check
    _
  $region63: #{tpu_custom_call.1} parent=0 // pred_check_branch
    %56 = sbr.rel (0) target = $region65
  $region64: #{tpu_custom_call.1} parent=0 // pred_region
    _
  $region65: #{tpu_custom_call.1} parent=0 // pred_fallthru
    _
  // Predicated region
  $region66: #{tpu_custom_call.1} parent=0 // pred_check
    _
  $region67: #{tpu_custom_call.1} parent=0 // pred_check_branch
    %58 = sbr.rel (0) target = $region69
  $region68: #{tpu_custom_call.1} parent=0 // pred_region
    _
  $region69: #{tpu_custom_call.1} parent=0 // pred_fallthru
    _
  // Predicated region
  $region70: #{tpu_custom_call.1} parent=0 // pred_check
    _
  $region71: #{tpu_custom_call.1} parent=0 // pred_check_branch
    %60 = sbr.rel (0) target = $region73
  $region72: #{tpu_custom_call.1} parent=0 // pred_region
    _
  $region73: #{tpu_custom_call.1} parent=0 // pred_fallthru
    _
  // Predicated region
  $region74: #{tpu_custom_call.1} parent=0 // pred_check
    _
  $region75: #{tpu_custom_call.1} parent=0 // pred_check_branch
    %62 = sbr.rel (0) target = $region77
  $region76: #{tpu_custom_call.1} parent=0 // pred_region
    _
  $region77: #{tpu_custom_call.1} parent=0 // pred_fallthru
    _
  // Predicated region
  $region78: #{tpu_custom_call.1} parent=0 // pred_check
    _
  $region79: #{tpu_custom_call.1} parent=0 // pred_check_branch
    %64 = sbr.rel (0) target = $region81
  $region80: #{tpu_custom_call.1} parent=0 // pred_region
    _
  $region81: #{tpu_custom_call.1} parent=0 // pred_fallthru
    _
  %vm65 = vcmask 60416
  %66 = vst.msk [vmem:[#allocation2] sm:$0xf] %vm65, 0.0
  %67 = vst.msk [vmem:[#allocation2 + $0x18] sm:$0xf] %vm65, 0.0
  %68 = vst.msk [vmem:[#allocation2 + $0x30] sm:$0xf] %vm65, 0.0
  %69 = vst.msk [vmem:[#allocation2 + $0x48] sm:$0xf] %vm65, 0.0
  %v70 = vld [vmem:[%s0] sm:$0xff]
  %v71 = vld [vmem:[%s0 + $0x8] sm:$0xff]
  %v72 = vld [vmem:[%s0 + $0x10] sm:$0xff]
  %v73 = vld [vmem:[%s0 + $0x18] sm:$0xff]
  %v74 = vld [vmem:[%s0 + $0x20] sm:$0xff]
  %v75 = vld [vmem:[%s0 + $0x28] sm:$0xff]
  %v76 = vld [vmem:[%s0 + $0x30] sm:$0xff]
  %v77 = vld [vmem:[%s0 + $0x38] sm:$0xff]
  %v78 = vld [vmem:[%s1] sm:$0x3]
  %v79 = vld [vmem:[%s2] sm:$0xff]
  %v80 = vld [vmem:[%s2 + $0x8] sm:$0xff]
  %v81 = vld [vmem:[%s2 + $0x10] sm:$0xff]
  %v82 = vld [vmem:[%s3] sm:$0x1]
  %v83 = vld [vmem:[%s4] sm:$0xff]
  %v84 = vld [vmem:[%s5] sm:$0x1]
  %v85 = vld [vmem:[%s6] sm:$0x1]
  %vm86 = vcmask 64512
  %87 = vst.msk [vmem:[#allocation2 + $0x4] sm:$0xff] %vm86, %v70
  %88 = vst.msk [vmem:[#allocation2 + $0xc] sm:$0xff] %vm86, %v71
  %89 = vst.msk [vmem:[#allocation2 + $0x1c] sm:$0xff] %vm86, %v72
  %90 = vst.msk [vmem:[#allocation2 + $0x24] sm:$0xff] %vm86, %v73
  %91 = vst.msk [vmem:[#allocation2 + $0x34] sm:$0xff] %vm86, %v74
  %92 = vst.msk [vmem:[#allocation2 + $0x3c] sm:$0xff] %vm86, %v75
  %93 = vst.msk [vmem:[#allocation2 + $0x4c] sm:$0xff] %vm86, %v76
  %94 = vst.msk [vmem:[#allocation2 + $0x54] sm:$0xff] %vm86, %v77
  %v95 = vperm.slane %v78, 1
  %v96 = vmul.f32 %v95, %v70
  %v97 = vmul.f32 %v95, %v71
  %v98 = vmul.f32 %v95, %v72
  %v99 = vmul.f32 %v95, %v73
  %v100 = vmul.f32 %v95, %v74
  %v101 = vmul.f32 %v95, %v75
  %v102 = vmul.f32 %v95, %v76
  %v103 = vmul.f32 %v95, %v77
  %v104 = vld [vmem:[#allocation2 + $0x3] sm:$0xff]
  %v105 = vld [vmem:[#allocation2 + $0xb] sm:$0xff]
  %v106 = vld [vmem:[#allocation2 + $0x1b] sm:$0xff]
  %v107 = vld [vmem:[#allocation2 + $0x23] sm:$0xff]
  %v108 = vld [vmem:[#allocation2 + $0x33] sm:$0xff]
  %v109 = vld [vmem:[#allocation2 + $0x3b] sm:$0xff]
  %v110 = vld [vmem:[#allocation2 + $0x4b] sm:$0xff]
  %v111 = vld [vmem:[#allocation2 + $0x53] sm:$0xff]
  %v112 = vperm.slane %v78, 0
  %v113 = vmul.f32 %v112, %v104
  %v114 = vmul.f32 %v112, %v105
  %v115 = vmul.f32 %v112, %v106
  %v116 = vmul.f32 %v112, %v107
  %v117 = vmul.f32 %v112, %v108
  %v118 = vmul.f32 %v112, %v109
  %v119 = vmul.f32 %v112, %v110
  %v120 = vmul.f32 %v112, %v111
  %v121 = vadd.f32 %v96, %v113
  %v122 = vadd.f32 %v97, %v114
  %v123 = vadd.f32 %v98, %v115
  %v124 = vadd.f32 %v99, %v116
  %v125 = vadd.f32 %v100, %v117
  %v126 = vadd.f32 %v101, %v118
  %v127 = vadd.f32 %v102, %v119
  %v128 = vadd.f32 %v103, %v120
  %v130 = vsel %vm86, %v121, 0
  %v133 = vsel %vm86, %v122, 0
  %v136 = vsel %vm86, %v123, 0
  %v139 = vsel %vm86, %v124, 0
  %v142 = vsel %vm86, %v125, 0
  %v145 = vsel %vm86, %v126, 0
  %v148 = vsel %vm86, %v127, 0
  %v151 = vsel %vm86, %v128, 0
  %v154 = vsel %vm86, %v79, 0
  %v157 = vsel %vm86, %v80, 0
  %v160 = vsel %vm86, %v81, 0
  %162 = vmatpush.xpose.msra.mxu0 0.0
  %163 = vmatpush.xpose.msra.mxu0 0.0
  %164 = vmatpush.xpose.msra.mxu0 0.0
  %165 = vmatpush.xpose.msra.mxu0 0.0
  %166 = vmatpush.xpose.msra.mxu0 0.0
  %167 = vmatpush.xpose.msra.mxu0 0.0
  %168 = vmatpush.xpose.msra.mxu0 0.0
  %169 = vmatpush.xpose.msra.mxu0 0.0
  %170 = vmatpush.xpose.msra.mxu0 0.0
  %171 = vmatpush.xpose.msra.mxu0 0.0
  %172 = vmatpush.xpose.msra.mxu0 0.0
  %173 = vmatpush.xpose.msra.mxu0 0.0
  %174 = vmatpush.xpose.msra.mxu0 0.0
  %175 = vmatpush.xpose.msra.mxu0 %v160
  %176 = vmatpush.xpose.msra.mxu0 %v157
  %177 = vmatpush.xpose.msra.mxu0 %v154
  %178 = vmatmul.f32.gmra.mxu0 %v130
  %v179 = vpop.f32.mrf.mxu0
  %v180 = vadd.f32 0.0, %v179
  %181 = vmatmul.f32.gmra.mxu0 %v133
  %v182 = vpop.f32.mrf.mxu0
  %v183 = vadd.f32 0.0, %v182
  %184 = vmatmul.f32.gmra.mxu0 %v136
  %v185 = vpop.f32.mrf.mxu0
  %v186 = vadd.f32 0.0, %v185
  %187 = vmatmul.f32.gmra.mxu0 %v139
  %v188 = vpop.f32.mrf.mxu0
  %v189 = vadd.f32 0.0, %v188
  %190 = vmatmul.f32.gmra.mxu0 %v142
  %v191 = vpop.f32.mrf.mxu0
  %v192 = vadd.f32 0.0, %v191
  %193 = vmatmul.f32.gmra.mxu0 %v145
  %v194 = vpop.f32.mrf.mxu0
  %v195 = vadd.f32 0.0, %v194
  %196 = vmatmul.f32.gmra.mxu0 %v148
  %v197 = vpop.f32.mrf.mxu0
  %v198 = vadd.f32 0.0, %v197
  %199 = vmatmul.f32.gmra.mxu0 %v151
  %v200 = vpop.f32.mrf.mxu0
  %v201 = vadd.f32 0.0, %v200
  %202 = vdwg.mxu0
  %v204 = vperm.slane %v82, 0
  %v206 = vadd.f32 %v180, %v204
  %v207 = vadd.f32 %v183, %v204
  %v208 = vadd.f32 %v186, %v204
  %v209 = vadd.f32 %v189, %v204
  %v210 = vadd.f32 %v192, %v204
  %v211 = vadd.f32 %v195, %v204
  %v212 = vadd.f32 %v198, %v204
  %v213 = vadd.f32 %v201, %v204
  %222 = vrot.lane.b32.xlu0 %v206, 120
  %v223 = vpop.permute.xlu0 %222
  %224 = vrot.lane.b32.xlu0 %v207, 120
  %v225 = vpop.permute.xlu0 %224
  %226 = vrot.lane.b32.xlu0 %v208, 120
  %v227 = vpop.permute.xlu0 %226
  %228 = vrot.lane.b32.xlu0 %v209, 120
  %v229 = vpop.permute.xlu0 %228
  %230 = vrot.lane.b32.xlu0 %v210, 120
  %v231 = vpop.permute.xlu0 %230
  %232 = vrot.lane.b32.xlu0 %v211, 120
  %v233 = vpop.permute.xlu0 %232
  %234 = vrot.lane.b32.xlu0 %v212, 120
  %v235 = vpop.permute.xlu0 %234
  %236 = vrot.lane.b32.xlu0 %v213, 120
  %v237 = vpop.permute.xlu0 %236
  %v246 = vmul.f32 %v206, %v223
  %v247 = vmul.f32 %v207, %v225
  %v248 = vmul.f32 %v206, %v227
  %v249 = vmul.f32 %v207, %v229
  %v250 = vmul.f32 %v206, %v231
  %v251 = vmul.f32 %v207, %v233
  %v252 = vmul.f32 %v206, %v235
  %v253 = vmul.f32 %v207, %v237
  %v254 = vmul.f32 %v208, %v223
  %v255 = vmul.f32 %v209, %v225
  %v256 = vmul.f32 %v208, %v227
  %v257 = vmul.f32 %v209, %v229
  %v258 = vmul.f32 %v208, %v231
  %v259 = vmul.f32 %v209, %v233
  %v260 = vmul.f32 %v208, %v235
  %v261 = vmul.f32 %v209, %v237
  %v262 = vmul.f32 %v210, %v223
  %v263 = vmul.f32 %v211, %v225
  %v264 = vmul.f32 %v210, %v227
  %v265 = vmul.f32 %v211, %v229
  %v266 = vmul.f32 %v210, %v231
  %v267 = vmul.f32 %v211, %v233
  %v268 = vmul.f32 %v210, %v235
  %v269 = vmul.f32 %v211, %v237
  %v270 = vmul.f32 %v212, %v223
  %v271 = vmul.f32 %v213, %v225
  %v272 = vmul.f32 %v212, %v227
  %v273 = vmul.f32 %v213, %v229
  %v274 = vmul.f32 %v212, %v231
  %v275 = vmul.f32 %v213, %v233
  %v276 = vmul.f32 %v212, %v235
  %v277 = vmul.f32 %v213, %v237
  %v278 = vsel %vm86, %v246, -inf
  %v279 = vsel %vm86, %v248, -inf
  %v280 = vmax.f32 %v278, %v279
  %v281 = vsel %vm86, %v250, -inf
  %v282 = vmax.f32 %v280, %v281
  %v283 = vsel %vm86, %v252, -inf
  %v284 = vmax.f32 %v282, %v283
  %v285 = vsel %vm86, %v247, -inf
  %v286 = vsel %vm86, %v249, -inf
  %v287 = vmax.f32 %v285, %v286
  %v288 = vsel %vm86, %v251, -inf
  %v289 = vmax.f32 %v287, %v288
  %v290 = vsel %vm86, %v253, -inf
  %v291 = vmax.f32 %v289, %v290
  %v292 = vsel %vm86, %v254, -inf
  %v293 = vsel %vm86, %v256, -inf
  %v294 = vmax.f32 %v292, %v293
  %v295 = vsel %vm86, %v258, -inf
  %v296 = vmax.f32 %v294, %v295
  %v297 = vsel %vm86, %v260, -inf
  %v298 = vmax.f32 %v296, %v297
  %v299 = vsel %vm86, %v255, -inf
  %v300 = vsel %vm86, %v257, -inf
  %v301 = vmax.f32 %v299, %v300
  %v302 = vsel %vm86, %v259, -inf
  %v303 = vmax.f32 %v301, %v302
  %v304 = vsel %vm86, %v261, -inf
  %v305 = vmax.f32 %v303, %v304
  %v306 = vsel %vm86, %v262, -inf
  %v307 = vsel %vm86, %v264, -inf
  %v308 = vmax.f32 %v306, %v307
  %v309 = vsel %vm86, %v266, -inf
  %v310 = vmax.f32 %v308, %v309
  %v311 = vsel %vm86, %v268, -inf
  %v312 = vmax.f32 %v310, %v311
  %v313 = vsel %vm86, %v263, -inf
  %v314 = vsel %vm86, %v265, -inf
  %v315 = vmax.f32 %v313, %v314
  %v316 = vsel %vm86, %v267, -inf
  %v317 = vmax.f32 %v315, %v316
  %v318 = vsel %vm86, %v269, -inf
  %v319 = vmax.f32 %v317, %v318
  %v320 = vsel %vm86, %v270, -inf
  %v321 = vsel %vm86, %v272, -inf
  %v322 = vmax.f32 %v320, %v321
  %v323 = vsel %vm86, %v274, -inf
  %v324 = vmax.f32 %v322, %v323
  %v325 = vsel %vm86, %v276, -inf
  %v326 = vmax.f32 %v324, %v325
  %v327 = vsel %vm86, %v271, -inf
  %v328 = vsel %vm86, %v273, -inf
  %v329 = vmax.f32 %v327, %v328
  %v330 = vsel %vm86, %v275, -inf
  %v331 = vmax.f32 %v329, %v330
  %v332 = vsel %vm86, %v277, -inf
  %v333 = vmax.f32 %v331, %v332
  %v334 = vsub.f32 %v246, %v284
  %v335 = vsub.f32 %v247, %v291
  %v336 = vsub.f32 %v248, %v284
  %v337 = vsub.f32 %v249, %v291
  %v338 = vsub.f32 %v250, %v284
  %v339 = vsub.f32 %v251, %v291
  %v340 = vsub.f32 %v252, %v284
  %v341 = vsub.f32 %v253, %v291
  %v342 = vsub.f32 %v254, %v298
  %v343 = vsub.f32 %v255, %v305
  %v344 = vsub.f32 %v256, %v298
  %v345 = vsub.f32 %v257, %v305
  %v346 = vsub.f32 %v258, %v298
  %v347 = vsub.f32 %v259, %v305
  %v348 = vsub.f32 %v260, %v298
  %v349 = vsub.f32 %v261, %v305
  %v350 = vsub.f32 %v262, %v312
  %v351 = vsub.f32 %v263, %v319
  %v352 = vsub.f32 %v264, %v312
  %v353 = vsub.f32 %v265, %v319
  %v354 = vsub.f32 %v266, %v312
  %v355 = vsub.f32 %v267, %v319
  %v356 = vsub.f32 %v268, %v312
  %v357 = vsub.f32 %v269, %v319
  %v358 = vsub.f32 %v270, %v326
  %v359 = vsub.f32 %v271, %v333
  %v360 = vsub.f32 %v272, %v326
  %v361 = vsub.f32 %v273, %v333
  %v362 = vsub.f32 %v274, %v326
  %v363 = vsub.f32 %v275, %v333
  %v364 = vsub.f32 %v276, %v326
  %v365 = vsub.f32 %v277, %v333
  %v366 = vmul.f32 %v334, 1.442695
  %v367 = vpow.pop %v366
  %v368 = vmul.f32 %v335, 1.442695
  %v369 = vpow.pop %v368
  %v370 = vmul.f32 %v336, 1.442695
  %v371 = vpow.pop %v370
  %v372 = vmul.f32 %v337, 1.442695
  %v373 = vpow.pop %v372
  %v374 = vmul.f32 %v338, 1.442695
  %v375 = vpow.pop %v374
  %v376 = vmul.f32 %v339, 1.442695
  %v377 = vpow.pop %v376
  %v378 = vmul.f32 %v340, 1.442695
  %v379 = vpow.pop %v378
  %v380 = vmul.f32 %v341, 1.442695
  %v381 = vpow.pop %v380
  %v382 = vmul.f32 %v342, 1.442695
  %v383 = vpow.pop %v382
  %v384 = vmul.f32 %v343, 1.442695
  %v385 = vpow.pop %v384
  %v386 = vmul.f32 %v344, 1.442695
  %v387 = vpow.pop %v386
  %v388 = vmul.f32 %v345, 1.442695
  %v389 = vpow.pop %v388
  %v390 = vmul.f32 %v346, 1.442695
  %v391 = vpow.pop %v390
  %v392 = vmul.f32 %v347, 1.442695
  %v393 = vpow.pop %v392
  %v394 = vmul.f32 %v348, 1.442695
  %v395 = vpow.pop %v394
  %v396 = vmul.f32 %v349, 1.442695
  %v397 = vpow.pop %v396
  %v398 = vmul.f32 %v350, 1.442695
  %v399 = vpow.pop %v398
  %v400 = vmul.f32 %v351, 1.442695
  %v401 = vpow.pop %v400
  %v402 = vmul.f32 %v352, 1.442695
  %v403 = vpow.pop %v402
  %v404 = vmul.f32 %v353, 1.442695
  %v405 = vpow.pop %v404
  %v406 = vmul.f32 %v354, 1.442695
  %v407 = vpow.pop %v406
  %v408 = vmul.f32 %v355, 1.442695
  %v409 = vpow.pop %v408
  %v410 = vmul.f32 %v356, 1.442695
  %v411 = vpow.pop %v410
  %v412 = vmul.f32 %v357, 1.442695
  %v413 = vpow.pop %v412
  %v414 = vmul.f32 %v358, 1.442695
  %v415 = vpow.pop %v414
  %v416 = vmul.f32 %v359, 1.442695
  %v417 = vpow.pop %v416
  %v418 = vmul.f32 %v360, 1.442695
  %v419 = vpow.pop %v418
  %v420 = vmul.f32 %v361, 1.442695
  %v421 = vpow.pop %v420
  %v422 = vmul.f32 %v362, 1.442695
  %v423 = vpow.pop %v422
  %v424 = vmul.f32 %v363, 1.442695
  %v425 = vpow.pop %v424
  %v426 = vmul.f32 %v364, 1.442695
  %v427 = vpow.pop %v426
  %v428 = vmul.f32 %v365, 1.442695
  %v429 = vpow.pop %v428
  %430 = vrot.lane.b32.xlu0 %v206, 112
  %v431 = vpop.permute.xlu0 %430
  %432 = vrot.lane.b32.xlu0 %v207, 112
  %v433 = vpop.permute.xlu0 %432
  %434 = vrot.lane.b32.xlu0 %v208, 112
  %v435 = vpop.permute.xlu0 %434
  %436 = vrot.lane.b32.xlu0 %v209, 112
  %v437 = vpop.permute.xlu0 %436
  %438 = vrot.lane.b32.xlu0 %v210, 112
  %v439 = vpop.permute.xlu0 %438
  %440 = vrot.lane.b32.xlu0 %v211, 112
  %v441 = vpop.permute.xlu0 %440
  %442 = vrot.lane.b32.xlu0 %v212, 112
  %v443 = vpop.permute.xlu0 %442
  %444 = vrot.lane.b32.xlu0 %v213, 112
  %v445 = vpop.permute.xlu0 %444
  %v454 = vmul.f32 %v367, %v431
  %v455 = vmul.f32 %v369, %v433
  %v456 = vmul.f32 %v371, %v435
  %v457 = vmul.f32 %v373, %v437
  %v458 = vmul.f32 %v375, %v439
  %v459 = vmul.f32 %v377, %v441
  %v460 = vmul.f32 %v379, %v443
  %v461 = vmul.f32 %v381, %v445
  %v462 = vmul.f32 %v383, %v431
  %v463 = vmul.f32 %v385, %v433
  %v464 = vmul.f32 %v387, %v435
  %v465 = vmul.f32 %v389, %v437
  %v466 = vmul.f32 %v391, %v439
  %v467 = vmul.f32 %v393, %v441
  %v468 = vmul.f32 %v395, %v443
  %v469 = vmul.f32 %v397, %v445
  %v470 = vmul.f32 %v399, %v431
  %v471 = vmul.f32 %v401, %v433
  %v472 = vmul.f32 %v403, %v435
  %v473 = vmul.f32 %v405, %v437
  %v474 = vmul.f32 %v407, %v439
  %v475 = vmul.f32 %v409, %v441
  %v476 = vmul.f32 %v411, %v443
  %v477 = vmul.f32 %v413, %v445
  %v478 = vmul.f32 %v415, %v431
  %v479 = vmul.f32 %v417, %v433
  %v480 = vmul.f32 %v419, %v435
  %v481 = vmul.f32 %v421, %v437
  %v482 = vmul.f32 %v423, %v439
  %v483 = vmul.f32 %v425, %v441
  %v484 = vmul.f32 %v427, %v443
  %v485 = vmul.f32 %v429, %v445
  %v486 = vsel %vm86, %v454, 0.0
  %v487 = vsel %vm86, %v456, 0.0
  %v488 = vadd.f32 %v486, %v487
  %v489 = vsel %vm86, %v458, 0.0
  %v490 = vadd.f32 %v488, %v489
  %v491 = vsel %vm86, %v460, 0.0
  %v492 = vadd.f32 %v490, %v491
  %v493 = vsel %vm86, %v455, 0.0
  %v494 = vsel %vm86, %v457, 0.0
  %v495 = vadd.f32 %v493, %v494
  %v496 = vsel %vm86, %v459, 0.0
  %v497 = vadd.f32 %v495, %v496
  %v498 = vsel %vm86, %v461, 0.0
  %v499 = vadd.f32 %v497, %v498
  %v500 = vsel %vm86, %v462, 0.0
  %v501 = vsel %vm86, %v464, 0.0
  %v502 = vadd.f32 %v500, %v501
  %v503 = vsel %vm86, %v466, 0.0
  %v504 = vadd.f32 %v502, %v503
  %v505 = vsel %vm86, %v468, 0.0
  %v506 = vadd.f32 %v504, %v505
  %v507 = vsel %vm86, %v463, 0.0
  %v508 = vsel %vm86, %v465, 0.0
  %v509 = vadd.f32 %v507, %v508
  %v510 = vsel %vm86, %v467, 0.0
  %v511 = vadd.f32 %v509, %v510
  %v512 = vsel %vm86, %v469, 0.0
  %v513 = vadd.f32 %v511, %v512
  %v514 = vsel %vm86, %v470, 0.0
  %v515 = vsel %vm86, %v472, 0.0
  %v516 = vadd.f32 %v514, %v515
  %v517 = vsel %vm86, %v474, 0.0
  %v518 = vadd.f32 %v516, %v517
  %v519 = vsel %vm86, %v476, 0.0
  %v520 = vadd.f32 %v518, %v519
  %v521 = vsel %vm86, %v471, 0.0
  %v522 = vsel %vm86, %v473, 0.0
  %v523 = vadd.f32 %v521, %v522
  %v524 = vsel %vm86, %v475, 0.0
  %v525 = vadd.f32 %v523, %v524
  %v526 = vsel %vm86, %v477, 0.0
  %v527 = vadd.f32 %v525, %v526
  %v528 = vsel %vm86, %v478, 0.0
  %v529 = vsel %vm86, %v480, 0.0
  %v530 = vadd.f32 %v528, %v529
  %v531 = vsel %vm86, %v482, 0.0
  %v532 = vadd.f32 %v530, %v531
  %v533 = vsel %vm86, %v484, 0.0
  %v534 = vadd.f32 %v532, %v533
  %v535 = vsel %vm86, %v479, 0.0
  %v536 = vsel %vm86, %v481, 0.0
  %v537 = vadd.f32 %v535, %v536
  %v538 = vsel %vm86, %v483, 0.0
  %v539 = vadd.f32 %v537, %v538
  %v540 = vsel %vm86, %v485, 0.0
  %v541 = vadd.f32 %v539, %v540
  %v542 = vsel %vm86, %v367, 0.0
  %v543 = vsel %vm86, %v371, 0.0
  %v544 = vadd.f32 %v542, %v543
  %v545 = vsel %vm86, %v375, 0.0
  %v546 = vadd.f32 %v544, %v545
  %v547 = vsel %vm86, %v379, 0.0
  %v548 = vadd.f32 %v546, %v547
  %v549 = vsel %vm86, %v369, 0.0
  %v550 = vsel %vm86, %v373, 0.0
  %v551 = vadd.f32 %v549, %v550
  %v552 = vsel %vm86, %v377, 0.0
  %v553 = vadd.f32 %v551, %v552
  %v554 = vsel %vm86, %v381, 0.0
  %v555 = vadd.f32 %v553, %v554
  %v556 = vsel %vm86, %v383, 0.0
  %v557 = vsel %vm86, %v387, 0.0
  %v558 = vadd.f32 %v556, %v557
  %v559 = vsel %vm86, %v391, 0.0
  %v560 = vadd.f32 %v558, %v559
  %v561 = vsel %vm86, %v395, 0.0
  %v562 = vadd.f32 %v560, %v561
  %v563 = vsel %vm86, %v385, 0.0
  %v564 = vsel %vm86, %v389, 0.0
  %v565 = vadd.f32 %v563, %v564
  %v566 = vsel %vm86, %v393, 0.0
  %v567 = vadd.f32 %v565, %v566
  %v568 = vsel %vm86, %v397, 0.0
  %v569 = vadd.f32 %v567, %v568
  %v570 = vsel %vm86, %v399, 0.0
  %v571 = vsel %vm86, %v403, 0.0
  %v572 = vadd.f32 %v570, %v571
  %v573 = vsel %vm86, %v407, 0.0
  %v574 = vadd.f32 %v572, %v573
  %v575 = vsel %vm86, %v411, 0.0
  %v576 = vadd.f32 %v574, %v575
  %v577 = vsel %vm86, %v401, 0.0
  %v578 = vsel %vm86, %v405, 0.0
  %v579 = vadd.f32 %v577, %v578
  %v580 = vsel %vm86, %v409, 0.0
  %v581 = vadd.f32 %v579, %v580
  %v582 = vsel %vm86, %v413, 0.0
  %v583 = vadd.f32 %v581, %v582
  %v584 = vsel %vm86, %v415, 0.0
  %v585 = vsel %vm86, %v419, 0.0
  %v586 = vadd.f32 %v584, %v585
  %v587 = vsel %vm86, %v423, 0.0
  %v588 = vadd.f32 %v586, %v587
  %v589 = vsel %vm86, %v427, 0.0
  %v590 = vadd.f32 %v588, %v589
  %v591 = vsel %vm86, %v417, 0.0
  %v592 = vsel %vm86, %v421, 0.0
  %v593 = vadd.f32 %v591, %v592
  %v594 = vsel %vm86, %v425, 0.0
  %v595 = vadd.f32 %v593, %v594
  %v596 = vsel %vm86, %v429, 0.0
  %v597 = vadd.f32 %v595, %v596
  %v598 = vrcp.pop %v548
  %v599 = vrcp.pop %v555
  %v600 = vrcp.pop %v562
  %v601 = vrcp.pop %v569
  %v602 = vrcp.pop %v576
  %v603 = vrcp.pop %v583
  %v604 = vrcp.pop %v590
  %v605 = vrcp.pop %v597
  %v606 = vmul.f32 %v492, %v598
  %v607 = vmul.f32 %v499, %v599
  %v608 = vmul.f32 %v506, %v600
  %v609 = vmul.f32 %v513, %v601
  %v610 = vmul.f32 %v520, %v602
  %v611 = vmul.f32 %v527, %v603
  %v612 = vmul.f32 %v534, %v604
  %v613 = vmul.f32 %v541, %v605
  %v615 = vsel %vm86, %v606, 0
  %v618 = vsel %vm86, %v607, 0
  %v621 = vsel %vm86, %v608, 0
  %v624 = vsel %vm86, %v609, 0
  %v627 = vsel %vm86, %v610, 0
  %v630 = vsel %vm86, %v611, 0
  %v633 = vsel %vm86, %v612, 0
  %v636 = vsel %vm86, %v613, 0
  %v639 = vsel %vm86, %v83, 0
  %641 = vmatpush.xpose.msra.mxu0 0.0
  %642 = vmatpush.xpose.msra.mxu0 0.0
  %643 = vmatpush.xpose.msra.mxu0 0.0
  %644 = vmatpush.xpose.msra.mxu0 0.0
  %645 = vmatpush.xpose.msra.mxu0 0.0
  %646 = vmatpush.xpose.msra.mxu0 0.0
  %647 = vmatpush.xpose.msra.mxu0 0.0
  %648 = vmatpush.xpose.msra.mxu0 0.0
  %649 = vmatpush.xpose.msra.mxu0 0.0
  %650 = vmatpush.xpose.msra.mxu0 0.0
  %651 = vmatpush.xpose.msra.mxu0 0.0
  %652 = vmatpush.xpose.msra.mxu0 0.0
  %653 = vmatpush.xpose.msra.mxu0 0.0
  %654 = vmatpush.xpose.msra.mxu0 0.0
  %655 = vmatpush.xpose.msra.mxu0 0.0
  %656 = vmatpush.xpose.msra.mxu0 %v639
  %657 = vmatmul.f32.gmra.mxu0 %v615
  %v658 = vpop.f32.mrf.mxu0
  %v659 = vadd.f32 0.0, %v658
  %660 = vmatmul.f32.gmra.mxu0 %v618
  %v661 = vpop.f32.mrf.mxu0
  %v662 = vadd.f32 0.0, %v661
  %663 = vmatmul.f32.gmra.mxu0 %v621
  %v664 = vpop.f32.mrf.mxu0
  %v665 = vadd.f32 0.0, %v664
  %666 = vmatmul.f32.gmra.mxu0 %v624
  %v667 = vpop.f32.mrf.mxu0
  %v668 = vadd.f32 0.0, %v667
  %669 = vmatmul.f32.gmra.mxu0 %v627
  %v670 = vpop.f32.mrf.mxu0
  %v671 = vadd.f32 0.0, %v670
  %672 = vmatmul.f32.gmra.mxu0 %v630
  %v673 = vpop.f32.mrf.mxu0
  %v674 = vadd.f32 0.0, %v673
  %675 = vmatmul.f32.gmra.mxu0 %v633
  %v676 = vpop.f32.mrf.mxu0
  %v677 = vadd.f32 0.0, %v676
  %678 = vmatmul.f32.gmra.mxu0 %v636
  %v679 = vpop.f32.mrf.mxu0
  %v680 = vadd.f32 0.0, %v679
  %681 = vdwg.mxu0
  %v683 = vperm.slane %v84, 0
  %v685 = vadd.f32 %v659, %v683
  %v686 = vadd.f32 %v662, %v683
  %v687 = vadd.f32 %v665, %v683
  %v688 = vadd.f32 %v668, %v683
  %v689 = vadd.f32 %v671, %v683
  %v690 = vadd.f32 %v674, %v683
  %v691 = vadd.f32 %v677, %v683
  %v692 = vadd.f32 %v680, %v683
  %vm693 = vcmp.gt.f32.partialorder %v685, 0.0
  %vm694 = vcmp.gt.f32.partialorder %v686, 0.0
  %vm695 = vcmp.gt.f32.partialorder %v687, 0.0
  %vm696 = vcmp.gt.f32.partialorder %v688, 0.0
  %vm697 = vcmp.gt.f32.partialorder %v689, 0.0
  %vm698 = vcmp.gt.f32.partialorder %v690, 0.0
  %vm699 = vcmp.gt.f32.partialorder %v691, 0.0
  %vm700 = vcmp.gt.f32.partialorder %v692, 0.0
  %v702 = vperm.slane %v85, 0
  %v704 = vmul.f32 %v702, %v685
  %v705 = vmul.f32 %v702, %v686
  %v706 = vmul.f32 %v702, %v687
  %v707 = vmul.f32 %v702, %v688
  %v708 = vmul.f32 %v702, %v689
  %v709 = vmul.f32 %v702, %v690
  %v710 = vmul.f32 %v702, %v691
  %v711 = vmul.f32 %v702, %v692
  %v712 = vsel %vm693, %v685, %v704
  %v713 = vsel %vm694, %v686, %v705
  %v714 = vsel %vm695, %v687, %v706
  %v715 = vsel %vm696, %v688, %v707
  %v716 = vsel %vm697, %v689, %v708
  %v717 = vsel %vm698, %v690, %v709
  %v718 = vsel %vm699, %v691, %v710
  %v719 = vsel %vm700, %v692, %v711
  %v720 = vld [vmem:[%s7] sm:$0x3]
  %v721 = vld [vmem:[%s8] sm:$0xff]
  %v722 = vld [vmem:[%s8 + $0x8] sm:$0xff]
  %v723 = vld [vmem:[%s8 + $0x10] sm:$0xff]
  %v724 = vld [vmem:[%s9] sm:$0x1]
  %v725 = vld [vmem:[%s10] sm:$0xff]
  %v726 = vld [vmem:[%s11] sm:$0x1]
  %v727 = vld [vmem:[%s12] sm:$0x1]
  %728 = vst.msk [vmem:[#allocation2 + $0x4] sm:$0xff] %vm86, %v712
  %729 = vst.msk [vmem:[#allocation2 + $0xc] sm:$0xff] %vm86, %v713
  %730 = vst.msk [vmem:[#allocation2 + $0x1c] sm:$0xff] %vm86, %v714
  %731 = vst.msk [vmem:[#allocation2 + $0x24] sm:$0xff] %vm86, %v715
  %732 = vst.msk [vmem:[#allocation2 + $0x34] sm:$0xff] %vm86, %v716
  %733 = vst.msk [vmem:[#allocation2 + $0x3c] sm:$0xff] %vm86, %v717
  %734 = vst.msk [vmem:[#allocation2 + $0x4c] sm:$0xff] %vm86, %v718
  %735 = vst.msk [vmem:[#allocation2 + $0x54] sm:$0xff] %vm86, %v719
  %v736 = vperm.slane %v720, 1
  %v737 = vmul.f32 %v736, %v712
  %v738 = vmul.f32 %v736, %v713
  %v739 = vmul.f32 %v736, %v714
  %v740 = vmul.f32 %v736, %v715
  %v741 = vmul.f32 %v736, %v716
  %v742 = vmul.f32 %v736, %v717
  %v743 = vmul.f32 %v736, %v718
  %v744 = vmul.f32 %v736, %v719
  %v745 = vld [vmem:[#allocation2 + $0x2] sm:$0xff]
  %v746 = vld [vmem:[#allocation2 + $0xa] sm:$0xff]
  %v747 = vld [vmem:[#allocation2 + $0x1a] sm:$0xff]
  %v748 = vld [vmem:[#allocation2 + $0x22] sm:$0xff]
  %v749 = vld [vmem:[#allocation2 + $0x32] sm:$0xff]
  %v750 = vld [vmem:[#allocation2 + $0x3a] sm:$0xff]
  %v751 = vld [vmem:[#allocation2 + $0x4a] sm:$0xff]
  %v752 = vld [vmem:[#allocation2 + $0x52] sm:$0xff]
  %v753 = vperm.slane %v720, 0
  %v754 = vmul.f32 %v753, %v745
  %v755 = vmul.f32 %v753, %v746
  %v756 = vmul.f32 %v753, %v747
  %v757 = vmul.f32 %v753, %v748
  %v758 = vmul.f32 %v753, %v749
  %v759 = vmul.f32 %v753, %v750
  %v760 = vmul.f32 %v753, %v751
  %v761 = vmul.f32 %v753, %v752
  %v762 = vadd.f32 %v737, %v754
  %v763 = vadd.f32 %v738, %v755
  %v764 = vadd.f32 %v739, %v756
  %v765 = vadd.f32 %v740, %v757
  %v766 = vadd.f32 %v741, %v758
  %v767 = vadd.f32 %v742, %v759
  %v768 = vadd.f32 %v743, %v760
  %v769 = vadd.f32 %v744, %v761
  %v771 = vsel %vm86, %v762, 0
  %v774 = vsel %vm86, %v763, 0
  %v777 = vsel %vm86, %v764, 0
  %v780 = vsel %vm86, %v765, 0
  %v783 = vsel %vm86, %v766, 0
  %v786 = vsel %vm86, %v767, 0
  %v789 = vsel %vm86, %v768, 0
  %v792 = vsel %vm86, %v769, 0
  %v795 = vsel %vm86, %v721, 0
  %v798 = vsel %vm86, %v722, 0
  %v801 = vsel %vm86, %v723, 0
  %803 = vmatpush.xpose.msra.mxu0 0.0
  %804 = vmatpush.xpose.msra.mxu0 0.0
  %805 = vmatpush.xpose.msra.mxu0 0.0
  %806 = vmatpush.xpose.msra.mxu0 0.0
  %807 = vmatpush.xpose.msra.mxu0 0.0
  %808 = vmatpush.xpose.msra.mxu0 0.0
  %809 = vmatpush.xpose.msra.mxu0 0.0
  %810 = vmatpush.xpose.msra.mxu0 0.0
  %811 = vmatpush.xpose.msra.mxu0 0.0
  %812 = vmatpush.xpose.msra.mxu0 0.0
  %813 = vmatpush.xpose.msra.mxu0 0.0
  %814 = vmatpush.xpose.msra.mxu0 0.0
  %815 = vmatpush.xpose.msra.mxu0 0.0
  %816 = vmatpush.xpose.msra.mxu0 %v801
  %817 = vmatpush.xpose.msra.mxu0 %v798
  %818 = vmatpush.xpose.msra.mxu0 %v795
  %819 = vmatmul.f32.gmra.mxu0 %v771
  %v820 = vpop.f32.mrf.mxu0
  %v821 = vadd.f32 0.0, %v820
  %822 = vmatmul.f32.gmra.mxu0 %v774
  %v823 = vpop.f32.mrf.mxu0
  %v824 = vadd.f32 0.0, %v823
  %825 = vmatmul.f32.gmra.mxu0 %v777
  %v826 = vpop.f32.mrf.mxu0
  %v827 = vadd.f32 0.0, %v826
  %828 = vmatmul.f32.gmra.mxu0 %v780
  %v829 = vpop.f32.mrf.mxu0
  %v830 = vadd.f32 0.0, %v829
  %831 = vmatmul.f32.gmra.mxu0 %v783
  %v832 = vpop.f32.mrf.mxu0
  %v833 = vadd.f32 0.0, %v832
  %834 = vmatmul.f32.gmra.mxu0 %v786
  %v835 = vpop.f32.mrf.mxu0
  %v836 = vadd.f32 0.0, %v835
  %837 = vmatmul.f32.gmra.mxu0 %v789
  %v838 = vpop.f32.mrf.mxu0
  %v839 = vadd.f32 0.0, %v838
  %840 = vmatmul.f32.gmra.mxu0 %v792
  %v841 = vpop.f32.mrf.mxu0
  %v842 = vadd.f32 0.0, %v841
  %843 = vdwg.mxu0
  %v845 = vperm.slane %v724, 0
  %v847 = vadd.f32 %v821, %v845
  %v848 = vadd.f32 %v824, %v845
  %v849 = vadd.f32 %v827, %v845
  %v850 = vadd.f32 %v830, %v845
  %v851 = vadd.f32 %v833, %v845
  %v852 = vadd.f32 %v836, %v845
  %v853 = vadd.f32 %v839, %v845
  %v854 = vadd.f32 %v842, %v845
  %863 = vrot.lane.b32.xlu0 %v847, 120
  %v864 = vpop.permute.xlu0 %863
  %865 = vrot.lane.b32.xlu0 %v848, 120
  %v866 = vpop.permute.xlu0 %865
  %867 = vrot.lane.b32.xlu0 %v849, 120
  %v868 = vpop.permute.xlu0 %867
  %869 = vrot.lane.b32.xlu0 %v850, 120
  %v870 = vpop.permute.xlu0 %869
  %871 = vrot.lane.b32.xlu0 %v851, 120
  %v872 = vpop.permute.xlu0 %871
  %873 = vrot.lane.b32.xlu0 %v852, 120
  %v874 = vpop.permute.xlu0 %873
  %875 = vrot.lane.b32.xlu0 %v853, 120
  %v876 = vpop.permute.xlu0 %875
  %877 = vrot.lane.b32.xlu0 %v854, 120
  %v878 = vpop.permute.xlu0 %877
  %v887 = vmul.f32 %v847, %v864
  %v888 = vmul.f32 %v848, %v866
  %v889 = vmul.f32 %v847, %v868
  %v890 = vmul.f32 %v848, %v870
  %v891 = vmul.f32 %v847, %v872
  %v892 = vmul.f32 %v848, %v874
  %v893 = vmul.f32 %v847, %v876
  %v894 = vmul.f32 %v848, %v878
  %v895 = vmul.f32 %v849, %v864
  %v896 = vmul.f32 %v850, %v866
  %v897 = vmul.f32 %v849, %v868
  %v898 = vmul.f32 %v850, %v870
  %v899 = vmul.f32 %v849, %v872
  %v900 = vmul.f32 %v850, %v874
  %v901 = vmul.f32 %v849, %v876
  %v902 = vmul.f32 %v850, %v878
  %v903 = vmul.f32 %v851, %v864
  %v904 = vmul.f32 %v852, %v866
  %v905 = vmul.f32 %v851, %v868
  %v906 = vmul.f32 %v852, %v870
  %v907 = vmul.f32 %v851, %v872
  %v908 = vmul.f32 %v852, %v874
  %v909 = vmul.f32 %v851, %v876
  %v910 = vmul.f32 %v852, %v878
  %v911 = vmul.f32 %v853, %v864
  %v912 = vmul.f32 %v854, %v866
  %v913 = vmul.f32 %v853, %v868
  %v914 = vmul.f32 %v854, %v870
  %v915 = vmul.f32 %v853, %v872
  %v916 = vmul.f32 %v854, %v874
  %v917 = vmul.f32 %v853, %v876
  %v918 = vmul.f32 %v854, %v878
  %v919 = vsel %vm86, %v887, -inf
  %v920 = vsel %vm86, %v889, -inf
  %v921 = vmax.f32 %v919, %v920
  %v922 = vsel %vm86, %v891, -inf
  %v923 = vmax.f32 %v921, %v922
  %v924 = vsel %vm86, %v893, -inf
  %v925 = vmax.f32 %v923, %v924
  %v926 = vsel %vm86, %v888, -inf
  %v927 = vsel %vm86, %v890, -inf
  %v928 = vmax.f32 %v926, %v927
  %v929 = vsel %vm86, %v892, -inf
  %v930 = vmax.f32 %v928, %v929
  %v931 = vsel %vm86, %v894, -inf
  %v932 = vmax.f32 %v930, %v931
  %v933 = vsel %vm86, %v895, -inf
  %v934 = vsel %vm86, %v897, -inf
  %v935 = vmax.f32 %v933, %v934
  %v936 = vsel %vm86, %v899, -inf
  %v937 = vmax.f32 %v935, %v936
  %v938 = vsel %vm86, %v901, -inf
  %v939 = vmax.f32 %v937, %v938
  %v940 = vsel %vm86, %v896, -inf
  %v941 = vsel %vm86, %v898, -inf
  %v942 = vmax.f32 %v940, %v941
  %v943 = vsel %vm86, %v900, -inf
  %v944 = vmax.f32 %v942, %v943
  %v945 = vsel %vm86, %v902, -inf
  %v946 = vmax.f32 %v944, %v945
  %v947 = vsel %vm86, %v903, -inf
  %v948 = vsel %vm86, %v905, -inf
  %v949 = vmax.f32 %v947, %v948
  %v950 = vsel %vm86, %v907, -inf
  %v951 = vmax.f32 %v949, %v950
  %v952 = vsel %vm86, %v909, -inf
  %v953 = vmax.f32 %v951, %v952
  %v954 = vsel %vm86, %v904, -inf
  %v955 = vsel %vm86, %v906, -inf
  %v956 = vmax.f32 %v954, %v955
  %v957 = vsel %vm86, %v908, -inf
  %v958 = vmax.f32 %v956, %v957
  %v959 = vsel %vm86, %v910, -inf
  %v960 = vmax.f32 %v958, %v959
  %v961 = vsel %vm86, %v911, -inf
  %v962 = vsel %vm86, %v913, -inf
  %v963 = vmax.f32 %v961, %v962
  %v964 = vsel %vm86, %v915, -inf
  %v965 = vmax.f32 %v963, %v964
  %v966 = vsel %vm86, %v917, -inf
  %v967 = vmax.f32 %v965, %v966
  %v968 = vsel %vm86, %v912, -inf
  %v969 = vsel %vm86, %v914, -inf
  %v970 = vmax.f32 %v968, %v969
  %v971 = vsel %vm86, %v916, -inf
  %v972 = vmax.f32 %v970, %v971
  %v973 = vsel %vm86, %v918, -inf
  %v974 = vmax.f32 %v972, %v973
  %v975 = vsub.f32 %v887, %v925
  %v976 = vsub.f32 %v888, %v932
  %v977 = vsub.f32 %v889, %v925
  %v978 = vsub.f32 %v890, %v932
  %v979 = vsub.f32 %v891, %v925
  %v980 = vsub.f32 %v892, %v932
  %v981 = vsub.f32 %v893, %v925
  %v982 = vsub.f32 %v894, %v932
  %v983 = vsub.f32 %v895, %v939
  %v984 = vsub.f32 %v896, %v946
  %v985 = vsub.f32 %v897, %v939
  %v986 = vsub.f32 %v898, %v946
  %v987 = vsub.f32 %v899, %v939
  %v988 = vsub.f32 %v900, %v946
  %v989 = vsub.f32 %v901, %v939
  %v990 = vsub.f32 %v902, %v946
  %v991 = vsub.f32 %v903, %v953
  %v992 = vsub.f32 %v904, %v960
  %v993 = vsub.f32 %v905, %v953
  %v994 = vsub.f32 %v906, %v960
  %v995 = vsub.f32 %v907, %v953
  %v996 = vsub.f32 %v908, %v960
  %v997 = vsub.f32 %v909, %v953
  %v998 = vsub.f32 %v910, %v960
  %v999 = vsub.f32 %v911, %v967
  %v1000 = vsub.f32 %v912, %v974
  %v1001 = vsub.f32 %v913, %v967
  %v1002 = vsub.f32 %v914, %v974
  %v1003 = vsub.f32 %v915, %v967
  %v1004 = vsub.f32 %v916, %v974
  %v1005 = vsub.f32 %v917, %v967
  %v1006 = vsub.f32 %v918, %v974
  %v1007 = vmul.f32 %v975, 1.442695
  %v1008 = vpow.pop %v1007
  %v1009 = vmul.f32 %v976, 1.442695
  %v1010 = vpow.pop %v1009
  %v1011 = vmul.f32 %v977, 1.442695
  %v1012 = vpow.pop %v1011
  %v1013 = vmul.f32 %v978, 1.442695
  %v1014 = vpow.pop %v1013
  %v1015 = vmul.f32 %v979, 1.442695
  %v1016 = vpow.pop %v1015
  %v1017 = vmul.f32 %v980, 1.442695
  %v1018 = vpow.pop %v1017
  %v1019 = vmul.f32 %v981, 1.442695
  %v1020 = vpow.pop %v1019
  %v1021 = vmul.f32 %v982, 1.442695
  %v1022 = vpow.pop %v1021
  %v1023 = vmul.f32 %v983, 1.442695
  %v1024 = vpow.pop %v1023
  %v1025 = vmul.f32 %v984, 1.442695
  %v1026 = vpow.pop %v1025
  %v1027 = vmul.f32 %v985, 1.442695
  %v1028 = vpow.pop %v1027
  %v1029 = vmul.f32 %v986, 1.442695
  %v1030 = vpow.pop %v1029
  %v1031 = vmul.f32 %v987, 1.442695
  %v1032 = vpow.pop %v1031
  %v1033 = vmul.f32 %v988, 1.442695
  %v1034 = vpow.pop %v1033
  %v1035 = vmul.f32 %v989, 1.442695
  %v1036 = vpow.pop %v1035
  %v1037 = vmul.f32 %v990, 1.442695
  %v1038 = vpow.pop %v1037
  %v1039 = vmul.f32 %v991, 1.442695
  %v1040 = vpow.pop %v1039
  %v1041 = vmul.f32 %v992, 1.442695
  %v1042 = vpow.pop %v1041
  %v1043 = vmul.f32 %v993, 1.442695
  %v1044 = vpow.pop %v1043
  %v1045 = vmul.f32 %v994, 1.442695
  %v1046 = vpow.pop %v1045
  %v1047 = vmul.f32 %v995, 1.442695
  %v1048 = vpow.pop %v1047
  %v1049 = vmul.f32 %v996, 1.442695
  %v1050 = vpow.pop %v1049
  %v1051 = vmul.f32 %v997, 1.442695
  %v1052 = vpow.pop %v1051
  %v1053 = vmul.f32 %v998, 1.442695
  %v1054 = vpow.pop %v1053
  %v1055 = vmul.f32 %v999, 1.442695
  %v1056 = vpow.pop %v1055
  %v1057 = vmul.f32 %v1000, 1.442695
  %v1058 = vpow.pop %v1057
  %v1059 = vmul.f32 %v1001, 1.442695
  %v1060 = vpow.pop %v1059
  %v1061 = vmul.f32 %v1002, 1.442695
  %v1062 = vpow.pop %v1061
  %v1063 = vmul.f32 %v1003, 1.442695
  %v1064 = vpow.pop %v1063
  %v1065 = vmul.f32 %v1004, 1.442695
  %v1066 = vpow.pop %v1065
  %v1067 = vmul.f32 %v1005, 1.442695
  %v1068 = vpow.pop %v1067
  %v1069 = vmul.f32 %v1006, 1.442695
  %v1070 = vpow.pop %v1069
  %1071 = vrot.lane.b32.xlu0 %v847, 112
  %v1072 = vpop.permute.xlu0 %1071
  %1073 = vrot.lane.b32.xlu0 %v848, 112
  %v1074 = vpop.permute.xlu0 %1073
  %1075 = vrot.lane.b32.xlu0 %v849, 112
  %v1076 = vpop.permute.xlu0 %1075
  %1077 = vrot.lane.b32.xlu0 %v850, 112
  %v1078 = vpop.permute.xlu0 %1077
  %1079 = vrot.lane.b32.xlu0 %v851, 112
  %v1080 = vpop.permute.xlu0 %1079
  %1081 = vrot.lane.b32.xlu0 %v852, 112
  %v1082 = vpop.permute.xlu0 %1081
  %1083 = vrot.lane.b32.xlu0 %v853, 112
  %v1084 = vpop.permute.xlu0 %1083
  %1085 = vrot.lane.b32.xlu0 %v854, 112
  %v1086 = vpop.permute.xlu0 %1085
  %v1095 = vmul.f32 %v1008, %v1072
  %v1096 = vmul.f32 %v1010, %v1074
  %v1097 = vmul.f32 %v1012, %v1076
  %v1098 = vmul.f32 %v1014, %v1078
  %v1099 = vmul.f32 %v1016, %v1080
  %v1100 = vmul.f32 %v1018, %v1082
  %v1101 = vmul.f32 %v1020, %v1084
  %v1102 = vmul.f32 %v1022, %v1086
  %v1103 = vmul.f32 %v1024, %v1072
  %v1104 = vmul.f32 %v1026, %v1074
  %v1105 = vmul.f32 %v1028, %v1076
  %v1106 = vmul.f32 %v1030, %v1078
  %v1107 = vmul.f32 %v1032, %v1080
  %v1108 = vmul.f32 %v1034, %v1082
  %v1109 = vmul.f32 %v1036, %v1084
  %v1110 = vmul.f32 %v1038, %v1086
  %v1111 = vmul.f32 %v1040, %v1072
  %v1112 = vmul.f32 %v1042, %v1074
  %v1113 = vmul.f32 %v1044, %v1076
  %v1114 = vmul.f32 %v1046, %v1078
  %v1115 = vmul.f32 %v1048, %v1080
  %v1116 = vmul.f32 %v1050, %v1082
  %v1117 = vmul.f32 %v1052, %v1084
  %v1118 = vmul.f32 %v1054, %v1086
  %v1119 = vmul.f32 %v1056, %v1072
  %v1120 = vmul.f32 %v1058, %v1074
  %v1121 = vmul.f32 %v1060, %v1076
  %v1122 = vmul.f32 %v1062, %v1078
  %v1123 = vmul.f32 %v1064, %v1080
  %v1124 = vmul.f32 %v1066, %v1082
  %v1125 = vmul.f32 %v1068, %v1084
  %v1126 = vmul.f32 %v1070, %v1086
  %v1127 = vsel %vm86, %v1095, 0.0
  %v1128 = vsel %vm86, %v1097, 0.0
  %v1129 = vadd.f32 %v1127, %v1128
  %v1130 = vsel %vm86, %v1099, 0.0
  %v1131 = vadd.f32 %v1129, %v1130
  %v1132 = vsel %vm86, %v1101, 0.0
  %v1133 = vadd.f32 %v1131, %v1132
  %v1134 = vsel %vm86, %v1096, 0.0
  %v1135 = vsel %vm86, %v1098, 0.0
  %v1136 = vadd.f32 %v1134, %v1135
  %v1137 = vsel %vm86, %v1100, 0.0
  %v1138 = vadd.f32 %v1136, %v1137
  %v1139 = vsel %vm86, %v1102, 0.0
  %v1140 = vadd.f32 %v1138, %v1139
  %v1141 = vsel %vm86, %v1103, 0.0
  %v1142 = vsel %vm86, %v1105, 0.0
  %v1143 = vadd.f32 %v1141, %v1142
  %v1144 = vsel %vm86, %v1107, 0.0
  %v1145 = vadd.f32 %v1143, %v1144
  %v1146 = vsel %vm86, %v1109, 0.0
  %v1147 = vadd.f32 %v1145, %v1146
  %v1148 = vsel %vm86, %v1104, 0.0
  %v1149 = vsel %vm86, %v1106, 0.0
  %v1150 = vadd.f32 %v1148, %v1149
  %v1151 = vsel %vm86, %v1108, 0.0
  %v1152 = vadd.f32 %v1150, %v1151
  %v1153 = vsel %vm86, %v1110, 0.0
  %v1154 = vadd.f32 %v1152, %v1153
  %v1155 = vsel %vm86, %v1111, 0.0
  %v1156 = vsel %vm86, %v1113, 0.0
  %v1157 = vadd.f32 %v1155, %v1156
  %v1158 = vsel %vm86, %v1115, 0.0
  %v1159 = vadd.f32 %v1157, %v1158
  %v1160 = vsel %vm86, %v1117, 0.0
  %v1161 = vadd.f32 %v1159, %v1160
  %v1162 = vsel %vm86, %v1112, 0.0
  %v1163 = vsel %vm86, %v1114, 0.0
  %v1164 = vadd.f32 %v1162, %v1163
  %v1165 = vsel %vm86, %v1116, 0.0
  %v1166 = vadd.f32 %v1164, %v1165
  %v1167 = vsel %vm86, %v1118, 0.0
  %v1168 = vadd.f32 %v1166, %v1167
  %v1169 = vsel %vm86, %v1119, 0.0
  %v1170 = vsel %vm86, %v1121, 0.0
  %v1171 = vadd.f32 %v1169, %v1170
  %v1172 = vsel %vm86, %v1123, 0.0
  %v1173 = vadd.f32 %v1171, %v1172
  %v1174 = vsel %vm86, %v1125, 0.0
  %v1175 = vadd.f32 %v1173, %v1174
  %v1176 = vsel %vm86, %v1120, 0.0
  %v1177 = vsel %vm86, %v1122, 0.0
  %v1178 = vadd.f32 %v1176, %v1177
  %v1179 = vsel %vm86, %v1124, 0.0
  %v1180 = vadd.f32 %v1178, %v1179
  %v1181 = vsel %vm86, %v1126, 0.0
  %v1182 = vadd.f32 %v1180, %v1181
  %v1183 = vsel %vm86, %v1008, 0.0
  %v1184 = vsel %vm86, %v1012, 0.0
  %v1185 = vadd.f32 %v1183, %v1184
  %v1186 = vsel %vm86, %v1016, 0.0
  %v1187 = vadd.f32 %v1185, %v1186
  %v1188 = vsel %vm86, %v1020, 0.0
  %v1189 = vadd.f32 %v1187, %v1188
  %v1190 = vsel %vm86, %v1010, 0.0
  %v1191 = vsel %vm86, %v1014, 0.0
  %v1192 = vadd.f32 %v1190, %v1191
  %v1193 = vsel %vm86, %v1018, 0.0
  %v1194 = vadd.f32 %v1192, %v1193
  %v1195 = vsel %vm86, %v1022, 0.0
  %v1196 = vadd.f32 %v1194, %v1195
  %v1197 = vsel %vm86, %v1024, 0.0
  %v1198 = vsel %vm86, %v1028, 0.0
  %v1199 = vadd.f32 %v1197, %v1198
  %v1200 = vsel %vm86, %v1032, 0.0
  %v1201 = vadd.f32 %v1199, %v1200
  %v1202 = vsel %vm86, %v1036, 0.0
  %v1203 = vadd.f32 %v1201, %v1202
  %v1204 = vsel %vm86, %v1026, 0.0
  %v1205 = vsel %vm86, %v1030, 0.0
  %v1206 = vadd.f32 %v1204, %v1205
  %v1207 = vsel %vm86, %v1034, 0.0
  %v1208 = vadd.f32 %v1206, %v1207
  %v1209 = vsel %vm86, %v1038, 0.0
  %v1210 = vadd.f32 %v1208, %v1209
  %v1211 = vsel %vm86, %v1040, 0.0
  %v1212 = vsel %vm86, %v1044, 0.0
  %v1213 = vadd.f32 %v1211, %v1212
  %v1214 = vsel %vm86, %v1048, 0.0
  %v1215 = vadd.f32 %v1213, %v1214
  %v1216 = vsel %vm86, %v1052, 0.0
  %v1217 = vadd.f32 %v1215, %v1216
  %v1218 = vsel %vm86, %v1042, 0.0
  %v1219 = vsel %vm86, %v1046, 0.0
  %v1220 = vadd.f32 %v1218, %v1219
  %v1221 = vsel %vm86, %v1050, 0.0
  %v1222 = vadd.f32 %v1220, %v1221
  %v1223 = vsel %vm86, %v1054, 0.0
  %v1224 = vadd.f32 %v1222, %v1223
  %v1225 = vsel %vm86, %v1056, 0.0
  %v1226 = vsel %vm86, %v1060, 0.0
  %v1227 = vadd.f32 %v1225, %v1226
  %v1228 = vsel %vm86, %v1064, 0.0
  %v1229 = vadd.f32 %v1227, %v1228
  %v1230 = vsel %vm86, %v1068, 0.0
  %v1231 = vadd.f32 %v1229, %v1230
  %v1232 = vsel %vm86, %v1058, 0.0
  %v1233 = vsel %vm86, %v1062, 0.0
  %v1234 = vadd.f32 %v1232, %v1233
  %v1235 = vsel %vm86, %v1066, 0.0
  %v1236 = vadd.f32 %v1234, %v1235
  %v1237 = vsel %vm86, %v1070, 0.0
  %v1238 = vadd.f32 %v1236, %v1237
  %v1239 = vrcp.pop %v1189
  %v1240 = vrcp.pop %v1196
  %v1241 = vrcp.pop %v1203
  %v1242 = vrcp.pop %v1210
  %v1243 = vrcp.pop %v1217
  %v1244 = vrcp.pop %v1224
  %v1245 = vrcp.pop %v1231
  %v1246 = vrcp.pop %v1238
  %v1247 = vmul.f32 %v1133, %v1239
  %v1248 = vmul.f32 %v1140, %v1240
  %v1249 = vmul.f32 %v1147, %v1241
  %v1250 = vmul.f32 %v1154, %v1242
  %v1251 = vmul.f32 %v1161, %v1243
  %v1252 = vmul.f32 %v1168, %v1244
  %v1253 = vmul.f32 %v1175, %v1245
  %v1254 = vmul.f32 %v1182, %v1246
  %v1256 = vsel %vm86, %v1247, 0
  %v1259 = vsel %vm86, %v1248, 0
  %v1262 = vsel %vm86, %v1249, 0
  %v1265 = vsel %vm86, %v1250, 0
  %v1268 = vsel %vm86, %v1251, 0
  %v1271 = vsel %vm86, %v1252, 0
  %v1274 = vsel %vm86, %v1253, 0
  %v1277 = vsel %vm86, %v1254, 0
  %v1280 = vsel %vm86, %v725, 0
  %1282 = vmatpush.xpose.msra.mxu0 0.0
  %1283 = vmatpush.xpose.msra.mxu0 0.0
  %1284 = vmatpush.xpose.msra.mxu0 0.0
  %1285 = vmatpush.xpose.msra.mxu0 0.0
  %1286 = vmatpush.xpose.msra.mxu0 0.0
  %1287 = vmatpush.xpose.msra.mxu0 0.0
  %1288 = vmatpush.xpose.msra.mxu0 0.0
  %1289 = vmatpush.xpose.msra.mxu0 0.0
  %1290 = vmatpush.xpose.msra.mxu0 0.0
  %1291 = vmatpush.xpose.msra.mxu0 0.0
  %1292 = vmatpush.xpose.msra.mxu0 0.0
  %1293 = vmatpush.xpose.msra.mxu0 0.0
  %1294 = vmatpush.xpose.msra.mxu0 0.0
  %1295 = vmatpush.xpose.msra.mxu0 0.0
  %1296 = vmatpush.xpose.msra.mxu0 0.0
  %1297 = vmatpush.xpose.msra.mxu0 %v1280
  %1298 = vmatmul.f32.gmra.mxu0 %v1256
  %v1299 = vpop.f32.mrf.mxu0
  %v1300 = vadd.f32 0.0, %v1299
  %1301 = vmatmul.f32.gmra.mxu0 %v1259
  %v1302 = vpop.f32.mrf.mxu0
  %v1303 = vadd.f32 0.0, %v1302
  %1304 = vmatmul.f32.gmra.mxu0 %v1262
  %v1305 = vpop.f32.mrf.mxu0
  %v1306 = vadd.f32 0.0, %v1305
  %1307 = vmatmul.f32.gmra.mxu0 %v1265
  %v1308 = vpop.f32.mrf.mxu0
  %v1309 = vadd.f32 0.0, %v1308
  %1310 = vmatmul.f32.gmra.mxu0 %v1268
  %v1311 = vpop.f32.mrf.mxu0
  %v1312 = vadd.f32 0.0, %v1311
  %1313 = vmatmul.f32.gmra.mxu0 %v1271
  %v1314 = vpop.f32.mrf.mxu0
  %v1315 = vadd.f32 0.0, %v1314
  %1316 = vmatmul.f32.gmra.mxu0 %v1274
  %v1317 = vpop.f32.mrf.mxu0
  %v1318 = vadd.f32 0.0, %v1317
  %1319 = vmatmul.f32.gmra.mxu0 %v1277
  %v1320 = vpop.f32.mrf.mxu0
  %v1321 = vadd.f32 0.0, %v1320
  %1322 = vdwg.mxu0
  %v1324 = vperm.slane %v726, 0
  %v1326 = vadd.f32 %v1300, %v1324
  %v1327 = vadd.f32 %v1303, %v1324
  %v1328 = vadd.f32 %v1306, %v1324
  %v1329 = vadd.f32 %v1309, %v1324
  %v1330 = vadd.f32 %v1312, %v1324
  %v1331 = vadd.f32 %v1315, %v1324
  %v1332 = vadd.f32 %v1318, %v1324
  %v1333 = vadd.f32 %v1321, %v1324
  %vm1334 = vcmp.gt.f32.partialorder %v1326, 0.0
  %vm1335 = vcmp.gt.f32.partialorder %v1327, 0.0
  %vm1336 = vcmp.gt.f32.partialorder %v1328, 0.0
  %vm1337 = vcmp.gt.f32.partialorder %v1329, 0.0
  %vm1338 = vcmp.gt.f32.partialorder %v1330, 0.0
  %vm1339 = vcmp.gt.f32.partialorder %v1331, 0.0
  %vm1340 = vcmp.gt.f32.partialorder %v1332, 0.0
  %vm1341 = vcmp.gt.f32.partialorder %v1333, 0.0
  %v1343 = vperm.slane %v727, 0
  %v1345 = vmul.f32 %v1343, %v1326
  %v1346 = vmul.f32 %v1343, %v1327
  %v1347 = vmul.f32 %v1343, %v1328
  %v1348 = vmul.f32 %v1343, %v1329
  %v1349 = vmul.f32 %v1343, %v1330
  %v1350 = vmul.f32 %v1343, %v1331
  %v1351 = vmul.f32 %v1343, %v1332
  %v1352 = vmul.f32 %v1343, %v1333
  %v1353 = vsel %vm1334, %v1326, %v1345
  %v1354 = vsel %vm1335, %v1327, %v1346
  %v1355 = vsel %vm1336, %v1328, %v1347
  %v1356 = vsel %vm1337, %v1329, %v1348
  %v1357 = vsel %vm1338, %v1330, %v1349
  %v1358 = vsel %vm1339, %v1331, %v1350
  %v1359 = vsel %vm1340, %v1332, %v1351
  %v1360 = vsel %vm1341, %v1333, %v1352
  %v1361 = vld [vmem:[%s13] sm:$0x3]
  %v1362 = vld [vmem:[%s14] sm:$0xff]
  %v1363 = vld [vmem:[%s14 + $0x8] sm:$0xff]
  %v1364 = vld [vmem:[%s14 + $0x10] sm:$0xff]
  %v1365 = vld [vmem:[%s15] sm:$0x1]
  %v1366 = vld [vmem:[%s16] sm:$0xff]
  %v1367 = vld [vmem:[%s17] sm:$0x1]
  %v1368 = vld [vmem:[%s18] sm:$0xff]
  %v1369 = vld [vmem:[%s19] sm:$0x1]
  %1370 = vst.msk [vmem:[#allocation2 + $0x4] sm:$0xff] %vm86, %v1353
  %1371 = vst.msk [vmem:[#allocation2 + $0xc] sm:$0xff] %vm86, %v1354
  %1372 = vst.msk [vmem:[#allocation2 + $0x1c] sm:$0xff] %vm86, %v1355
  %1373 = vst.msk [vmem:[#allocation2 + $0x24] sm:$0xff] %vm86, %v1356
  %1374 = vst.msk [vmem:[#allocation2 + $0x34] sm:$0xff] %vm86, %v1357
  %1375 = vst.msk [vmem:[#allocation2 + $0x3c] sm:$0xff] %vm86, %v1358
  %1376 = vst.msk [vmem:[#allocation2 + $0x4c] sm:$0xff] %vm86, %v1359
  %1377 = vst.msk [vmem:[#allocation2 + $0x54] sm:$0xff] %vm86, %v1360
  %v1378 = vperm.slane %v1361, 1
  %v1379 = vmul.f32 %v1378, %v1353
  %v1380 = vmul.f32 %v1378, %v1354
  %v1381 = vmul.f32 %v1378, %v1355
  %v1382 = vmul.f32 %v1378, %v1356
  %v1383 = vmul.f32 %v1378, %v1357
  %v1384 = vmul.f32 %v1378, %v1358
  %v1385 = vmul.f32 %v1378, %v1359
  %v1386 = vmul.f32 %v1378, %v1360
  %v1387 = vld [vmem:[#allocation2] sm:$0xff]
  %v1388 = vld [vmem:[#allocation2 + $0x8] sm:$0xff]
  %v1389 = vld [vmem:[#allocation2 + $0x18] sm:$0xff]
  %v1390 = vld [vmem:[#allocation2 + $0x20] sm:$0xff]
  %v1391 = vld [vmem:[#allocation2 + $0x30] sm:$0xff]
  %v1392 = vld [vmem:[#allocation2 + $0x38] sm:$0xff]
  %v1393 = vld [vmem:[#allocation2 + $0x48] sm:$0xff]
  %v1394 = vld [vmem:[#allocation2 + $0x50] sm:$0xff]
  %v1395 = vperm.slane %v1361, 0
  %v1396 = vmul.f32 %v1395, %v1387
  %v1397 = vmul.f32 %v1395, %v1388
  %v1398 = vmul.f32 %v1395, %v1389
  %v1399 = vmul.f32 %v1395, %v1390
  %v1400 = vmul.f32 %v1395, %v1391
  %v1401 = vmul.f32 %v1395, %v1392
  %v1402 = vmul.f32 %v1395, %v1393
  %v1403 = vmul.f32 %v1395, %v1394
  %v1404 = vadd.f32 %v1379, %v1396
  %v1405 = vadd.f32 %v1380, %v1397
  %v1406 = vadd.f32 %v1381, %v1398
  %v1407 = vadd.f32 %v1382, %v1399
  %v1408 = vadd.f32 %v1383, %v1400
  %v1409 = vadd.f32 %v1384, %v1401
  %v1410 = vadd.f32 %v1385, %v1402
  %v1411 = vadd.f32 %v1386, %v1403
  %v1413 = vsel %vm86, %v1404, 0
  %v1416 = vsel %vm86, %v1405, 0
  %v1419 = vsel %vm86, %v1406, 0
  %v1422 = vsel %vm86, %v1407, 0
  %v1425 = vsel %vm86, %v1408, 0
  %v1428 = vsel %vm86, %v1409, 0
  %v1431 = vsel %vm86, %v1410, 0
  %v1434 = vsel %vm86, %v1411, 0
  %v1437 = vsel %vm86, %v1362, 0
  %v1440 = vsel %vm86, %v1363, 0
  %v1443 = vsel %vm86, %v1364, 0
  %1445 = vmatpush.xpose.msra.mxu0 0.0
  %1446 = vmatpush.xpose.msra.mxu0 0.0
  %1447 = vmatpush.xpose.msra.mxu0 0.0
  %1448 = vmatpush.xpose.msra.mxu0 0.0
  %1449 = vmatpush.xpose.msra.mxu0 0.0
  %1450 = vmatpush.xpose.msra.mxu0 0.0
  %1451 = vmatpush.xpose.msra.mxu0 0.0
  %1452 = vmatpush.xpose.msra.mxu0 0.0
  %1453 = vmatpush.xpose.msra.mxu0 0.0
  %1454 = vmatpush.xpose.msra.mxu0 0.0
  %1455 = vmatpush.xpose.msra.mxu0 0.0
  %1456 = vmatpush.xpose.msra.mxu0 0.0
  %1457 = vmatpush.xpose.msra.mxu0 0.0
  %1458 = vmatpush.xpose.msra.mxu0 %v1443
  %1459 = vmatpush.xpose.msra.mxu0 %v1440
  %1460 = vmatpush.xpose.msra.mxu0 %v1437
  %1461 = vmatmul.f32.gmra.mxu0 %v1413
  %v1462 = vpop.f32.mrf.mxu0
  %v1463 = vadd.f32 0.0, %v1462
  %1464 = vmatmul.f32.gmra.mxu0 %v1416
  %v1465 = vpop.f32.mrf.mxu0
  %v1466 = vadd.f32 0.0, %v1465
  %1467 = vmatmul.f32.gmra.mxu0 %v1419
  %v1468 = vpop.f32.mrf.mxu0
  %v1469 = vadd.f32 0.0, %v1468
  %1470 = vmatmul.f32.gmra.mxu0 %v1422
  %v1471 = vpop.f32.mrf.mxu0
  %v1472 = vadd.f32 0.0, %v1471
  %1473 = vmatmul.f32.gmra.mxu0 %v1425
  %v1474 = vpop.f32.mrf.mxu0
  %v1475 = vadd.f32 0.0, %v1474
  %1476 = vmatmul.f32.gmra.mxu0 %v1428
  %v1477 = vpop.f32.mrf.mxu0
  %v1478 = vadd.f32 0.0, %v1477
  %1479 = vmatmul.f32.gmra.mxu0 %v1431
  %v1480 = vpop.f32.mrf.mxu0
  %v1481 = vadd.f32 0.0, %v1480
  %1482 = vmatmul.f32.gmra.mxu0 %v1434
  %v1483 = vpop.f32.mrf.mxu0
  %v1484 = vadd.f32 0.0, %v1483
  %1485 = vdwg.mxu0
  %v1487 = vperm.slane %v1365, 0
  %v1489 = vadd.f32 %v1463, %v1487
  %v1490 = vadd.f32 %v1466, %v1487
  %v1491 = vadd.f32 %v1469, %v1487
  %v1492 = vadd.f32 %v1472, %v1487
  %v1493 = vadd.f32 %v1475, %v1487
  %v1494 = vadd.f32 %v1478, %v1487
  %v1495 = vadd.f32 %v1481, %v1487
  %v1496 = vadd.f32 %v1484, %v1487
  %1505 = vrot.lane.b32.xlu0 %v1489, 120
  %v1506 = vpop.permute.xlu0 %1505
  %1507 = vrot.lane.b32.xlu0 %v1490, 120
  %v1508 = vpop.permute.xlu0 %1507
  %1509 = vrot.lane.b32.xlu0 %v1491, 120
  %v1510 = vpop.permute.xlu0 %1509
  %1511 = vrot.lane.b32.xlu0 %v1492, 120
  %v1512 = vpop.permute.xlu0 %1511
  %1513 = vrot.lane.b32.xlu0 %v1493, 120
  %v1514 = vpop.permute.xlu0 %1513
  %1515 = vrot.lane.b32.xlu0 %v1494, 120
  %v1516 = vpop.permute.xlu0 %1515
  %1517 = vrot.lane.b32.xlu0 %v1495, 120
  %v1518 = vpop.permute.xlu0 %1517
  %1519 = vrot.lane.b32.xlu0 %v1496, 120
  %v1520 = vpop.permute.xlu0 %1519
  %v1529 = vmul.f32 %v1489, %v1506
  %v1530 = vmul.f32 %v1490, %v1508
  %v1531 = vmul.f32 %v1489, %v1510
  %v1532 = vmul.f32 %v1490, %v1512
  %v1533 = vmul.f32 %v1489, %v1514
  %v1534 = vmul.f32 %v1490, %v1516
  %v1535 = vmul.f32 %v1489, %v1518
  %v1536 = vmul.f32 %v1490, %v1520
  %v1537 = vmul.f32 %v1491, %v1506
  %v1538 = vmul.f32 %v1492, %v1508
  %v1539 = vmul.f32 %v1491, %v1510
  %v1540 = vmul.f32 %v1492, %v1512
  %v1541 = vmul.f32 %v1491, %v1514
  %v1542 = vmul.f32 %v1492, %v1516
  %v1543 = vmul.f32 %v1491, %v1518
  %v1544 = vmul.f32 %v1492, %v1520
  %v1545 = vmul.f32 %v1493, %v1506
  %v1546 = vmul.f32 %v1494, %v1508
  %v1547 = vmul.f32 %v1493, %v1510
  %v1548 = vmul.f32 %v1494, %v1512
  %v1549 = vmul.f32 %v1493, %v1514
  %v1550 = vmul.f32 %v1494, %v1516
  %v1551 = vmul.f32 %v1493, %v1518
  %v1552 = vmul.f32 %v1494, %v1520
  %v1553 = vmul.f32 %v1495, %v1506
  %v1554 = vmul.f32 %v1496, %v1508
  %v1555 = vmul.f32 %v1495, %v1510
  %v1556 = vmul.f32 %v1496, %v1512
  %v1557 = vmul.f32 %v1495, %v1514
  %v1558 = vmul.f32 %v1496, %v1516
  %v1559 = vmul.f32 %v1495, %v1518
  %v1560 = vmul.f32 %v1496, %v1520
  %v1561 = vsel %vm86, %v1529, -inf
  %v1562 = vsel %vm86, %v1531, -inf
  %v1563 = vmax.f32 %v1561, %v1562
  %v1564 = vsel %vm86, %v1533, -inf
  %v1565 = vmax.f32 %v1563, %v1564
  %v1566 = vsel %vm86, %v1535, -inf
  %v1567 = vmax.f32 %v1565, %v1566
  %v1568 = vsel %vm86, %v1530, -inf
  %v1569 = vsel %vm86, %v1532, -inf
  %v1570 = vmax.f32 %v1568, %v1569
  %v1571 = vsel %vm86, %v1534, -inf
  %v1572 = vmax.f32 %v1570, %v1571
  %v1573 = vsel %vm86, %v1536, -inf
  %v1574 = vmax.f32 %v1572, %v1573
  %v1575 = vsel %vm86, %v1537, -inf
  %v1576 = vsel %vm86, %v1539, -inf
  %v1577 = vmax.f32 %v1575, %v1576
  %v1578 = vsel %vm86, %v1541, -inf
  %v1579 = vmax.f32 %v1577, %v1578
  %v1580 = vsel %vm86, %v1543, -inf
  %v1581 = vmax.f32 %v1579, %v1580
  %v1582 = vsel %vm86, %v1538, -inf
  %v1583 = vsel %vm86, %v1540, -inf
  %v1584 = vmax.f32 %v1582, %v1583
  %v1585 = vsel %vm86, %v1542, -inf
  %v1586 = vmax.f32 %v1584, %v1585
  %v1587 = vsel %vm86, %v1544, -inf
  %v1588 = vmax.f32 %v1586, %v1587
  %v1589 = vsel %vm86, %v1545, -inf
  %v1590 = vsel %vm86, %v1547, -inf
  %v1591 = vmax.f32 %v1589, %v1590
  %v1592 = vsel %vm86, %v1549, -inf
  %v1593 = vmax.f32 %v1591, %v1592
  %v1594 = vsel %vm86, %v1551, -inf
  %v1595 = vmax.f32 %v1593, %v1594
  %v1596 = vsel %vm86, %v1546, -inf
  %v1597 = vsel %vm86, %v1548, -inf
  %v1598 = vmax.f32 %v1596, %v1597
  %v1599 = vsel %vm86, %v1550, -inf
  %v1600 = vmax.f32 %v1598, %v1599
  %v1601 = vsel %vm86, %v1552, -inf
  %v1602 = vmax.f32 %v1600, %v1601
  %v1603 = vsel %vm86, %v1553, -inf
  %v1604 = vsel %vm86, %v1555, -inf
  %v1605 = vmax.f32 %v1603, %v1604
  %v1606 = vsel %vm86, %v1557, -inf
  %v1607 = vmax.f32 %v1605, %v1606
  %v1608 = vsel %vm86, %v1559, -inf
  %v1609 = vmax.f32 %v1607, %v1608
  %v1610 = vsel %vm86, %v1554, -inf
  %v1611 = vsel %vm86, %v1556, -inf
  %v1612 = vmax.f32 %v1610, %v1611
  %v1613 = vsel %vm86, %v1558, -inf
  %v1614 = vmax.f32 %v1612, %v1613
  %v1615 = vsel %vm86, %v1560, -inf
  %v1616 = vmax.f32 %v1614, %v1615
  %v1617 = vsub.f32 %v1529, %v1567
  %v1618 = vsub.f32 %v1530, %v1574
  %v1619 = vsub.f32 %v1531, %v1567
  %v1620 = vsub.f32 %v1532, %v1574
  %v1621 = vsub.f32 %v1533, %v1567
  %v1622 = vsub.f32 %v1534, %v1574
  %v1623 = vsub.f32 %v1535, %v1567
  %v1624 = vsub.f32 %v1536, %v1574
  %v1625 = vsub.f32 %v1537, %v1581
  %v1626 = vsub.f32 %v1538, %v1588
  %v1627 = vsub.f32 %v1539, %v1581
  %v1628 = vsub.f32 %v1540, %v1588
  %v1629 = vsub.f32 %v1541, %v1581
  %v1630 = vsub.f32 %v1542, %v1588
  %v1631 = vsub.f32 %v1543, %v1581
  %v1632 = vsub.f32 %v1544, %v1588
  %v1633 = vsub.f32 %v1545, %v1595
  %v1634 = vsub.f32 %v1546, %v1602
  %v1635 = vsub.f32 %v1547, %v1595
  %v1636 = vsub.f32 %v1548, %v1602
  %v1637 = vsub.f32 %v1549, %v1595
  %v1638 = vsub.f32 %v1550, %v1602
  %v1639 = vsub.f32 %v1551, %v1595
  %v1640 = vsub.f32 %v1552, %v1602
  %v1641 = vsub.f32 %v1553, %v1609
  %v1642 = vsub.f32 %v1554, %v1616
  %v1643 = vsub.f32 %v1555, %v1609
  %v1644 = vsub.f32 %v1556, %v1616
  %v1645 = vsub.f32 %v1557, %v1609
  %v1646 = vsub.f32 %v1558, %v1616
  %v1647 = vsub.f32 %v1559, %v1609
  %v1648 = vsub.f32 %v1560, %v1616
  %v1649 = vmul.f32 %v1617, 1.442695
  %v1650 = vpow.pop %v1649
  %v1651 = vmul.f32 %v1618, 1.442695
  %v1652 = vpow.pop %v1651
  %v1653 = vmul.f32 %v1619, 1.442695
  %v1654 = vpow.pop %v1653
  %v1655 = vmul.f32 %v1620, 1.442695
  %v1656 = vpow.pop %v1655
  %v1657 = vmul.f32 %v1621, 1.442695
  %v1658 = vpow.pop %v1657
  %v1659 = vmul.f32 %v1622, 1.442695
  %v1660 = vpow.pop %v1659
  %v1661 = vmul.f32 %v1623, 1.442695
  %v1662 = vpow.pop %v1661
  %v1663 = vmul.f32 %v1624, 1.442695
  %v1664 = vpow.pop %v1663
  %v1665 = vmul.f32 %v1625, 1.442695
  %v1666 = vpow.pop %v1665
  %v1667 = vmul.f32 %v1626, 1.442695
  %v1668 = vpow.pop %v1667
  %v1669 = vmul.f32 %v1627, 1.442695
  %v1670 = vpow.pop %v1669
  %v1671 = vmul.f32 %v1628, 1.442695
  %v1672 = vpow.pop %v1671
  %v1673 = vmul.f32 %v1629, 1.442695
  %v1674 = vpow.pop %v1673
  %v1675 = vmul.f32 %v1630, 1.442695
  %v1676 = vpow.pop %v1675
  %v1677 = vmul.f32 %v1631, 1.442695
  %v1678 = vpow.pop %v1677
  %v1679 = vmul.f32 %v1632, 1.442695
  %v1680 = vpow.pop %v1679
  %v1681 = vmul.f32 %v1633, 1.442695
  %v1682 = vpow.pop %v1681
  %v1683 = vmul.f32 %v1634, 1.442695
  %v1684 = vpow.pop %v1683
  %v1685 = vmul.f32 %v1635, 1.442695
  %v1686 = vpow.pop %v1685
  %v1687 = vmul.f32 %v1636, 1.442695
  %v1688 = vpow.pop %v1687
  %v1689 = vmul.f32 %v1637, 1.442695
  %v1690 = vpow.pop %v1689
  %v1691 = vmul.f32 %v1638, 1.442695
  %v1692 = vpow.pop %v1691
  %v1693 = vmul.f32 %v1639, 1.442695
  %v1694 = vpow.pop %v1693
  %v1695 = vmul.f32 %v1640, 1.442695
  %v1696 = vpow.pop %v1695
  %v1697 = vmul.f32 %v1641, 1.442695
  %v1698 = vpow.pop %v1697
  %v1699 = vmul.f32 %v1642, 1.442695
  %v1700 = vpow.pop %v1699
  %v1701 = vmul.f32 %v1643, 1.442695
  %v1702 = vpow.pop %v1701
  %v1703 = vmul.f32 %v1644, 1.442695
  %v1704 = vpow.pop %v1703
  %v1705 = vmul.f32 %v1645, 1.442695
  %v1706 = vpow.pop %v1705
  %v1707 = vmul.f32 %v1646, 1.442695
  %v1708 = vpow.pop %v1707
  %v1709 = vmul.f32 %v1647, 1.442695
  %v1710 = vpow.pop %v1709
  %v1711 = vmul.f32 %v1648, 1.442695
  %v1712 = vpow.pop %v1711
  %1713 = vrot.lane.b32.xlu0 %v1489, 112
  %v1714 = vpop.permute.xlu0 %1713
  %1715 = vrot.lane.b32.xlu0 %v1490, 112
  %v1716 = vpop.permute.xlu0 %1715
  %1717 = vrot.lane.b32.xlu0 %v1491, 112
  %v1718 = vpop.permute.xlu0 %1717
  %1719 = vrot.lane.b32.xlu0 %v1492, 112
  %v1720 = vpop.permute.xlu0 %1719
  %1721 = vrot.lane.b32.xlu0 %v1493, 112
  %v1722 = vpop.permute.xlu0 %1721
  %1723 = vrot.lane.b32.xlu0 %v1494, 112
  %v1724 = vpop.permute.xlu0 %1723
  %1725 = vrot.lane.b32.xlu0 %v1495, 112
  %v1726 = vpop.permute.xlu0 %1725
  %1727 = vrot.lane.b32.xlu0 %v1496, 112
  %v1728 = vpop.permute.xlu0 %1727
  %v1737 = vmul.f32 %v1650, %v1714
  %v1738 = vmul.f32 %v1652, %v1716
  %v1739 = vmul.f32 %v1654, %v1718
  %v1740 = vmul.f32 %v1656, %v1720
  %v1741 = vmul.f32 %v1658, %v1722
  %v1742 = vmul.f32 %v1660, %v1724
  %v1743 = vmul.f32 %v1662, %v1726
  %v1744 = vmul.f32 %v1664, %v1728
  %v1745 = vmul.f32 %v1666, %v1714
  %v1746 = vmul.f32 %v1668, %v1716
  %v1747 = vmul.f32 %v1670, %v1718
  %v1748 = vmul.f32 %v1672, %v1720
  %v1749 = vmul.f32 %v1674, %v1722
  %v1750 = vmul.f32 %v1676, %v1724
  %v1751 = vmul.f32 %v1678, %v1726
  %v1752 = vmul.f32 %v1680, %v1728
  %v1753 = vmul.f32 %v1682, %v1714
  %v1754 = vmul.f32 %v1684, %v1716
  %v1755 = vmul.f32 %v1686, %v1718
  %v1756 = vmul.f32 %v1688, %v1720
  %v1757 = vmul.f32 %v1690, %v1722
  %v1758 = vmul.f32 %v1692, %v1724
  %v1759 = vmul.f32 %v1694, %v1726
  %v1760 = vmul.f32 %v1696, %v1728
  %v1761 = vmul.f32 %v1698, %v1714
  %v1762 = vmul.f32 %v1700, %v1716
  %v1763 = vmul.f32 %v1702, %v1718
  %v1764 = vmul.f32 %v1704, %v1720
  %v1765 = vmul.f32 %v1706, %v1722
  %v1766 = vmul.f32 %v1708, %v1724
  %v1767 = vmul.f32 %v1710, %v1726
  %v1768 = vmul.f32 %v1712, %v1728
  %v1769 = vsel %vm86, %v1737, 0.0
  %v1770 = vsel %vm86, %v1739, 0.0
  %v1771 = vadd.f32 %v1769, %v1770
  %v1772 = vsel %vm86, %v1741, 0.0
  %v1773 = vadd.f32 %v1771, %v1772
  %v1774 = vsel %vm86, %v1743, 0.0
  %v1775 = vadd.f32 %v1773, %v1774
  %v1776 = vsel %vm86, %v1738, 0.0
  %v1777 = vsel %vm86, %v1740, 0.0
  %v1778 = vadd.f32 %v1776, %v1777
  %v1779 = vsel %vm86, %v1742, 0.0
  %v1780 = vadd.f32 %v1778, %v1779
  %v1781 = vsel %vm86, %v1744, 0.0
  %v1782 = vadd.f32 %v1780, %v1781
  %v1783 = vsel %vm86, %v1745, 0.0
  %v1784 = vsel %vm86, %v1747, 0.0
  %v1785 = vadd.f32 %v1783, %v1784
  %v1786 = vsel %vm86, %v1749, 0.0
  %v1787 = vadd.f32 %v1785, %v1786
  %v1788 = vsel %vm86, %v1751, 0.0
  %v1789 = vadd.f32 %v1787, %v1788
  %v1790 = vsel %vm86, %v1746, 0.0
  %v1791 = vsel %vm86, %v1748, 0.0
  %v1792 = vadd.f32 %v1790, %v1791
  %v1793 = vsel %vm86, %v1750, 0.0
  %v1794 = vadd.f32 %v1792, %v1793
  %v1795 = vsel %vm86, %v1752, 0.0
  %v1796 = vadd.f32 %v1794, %v1795
  %v1797 = vsel %vm86, %v1753, 0.0
  %v1798 = vsel %vm86, %v1755, 0.0
  %v1799 = vadd.f32 %v1797, %v1798
  %v1800 = vsel %vm86, %v1757, 0.0
  %v1801 = vadd.f32 %v1799, %v1800
  %v1802 = vsel %vm86, %v1759, 0.0
  %v1803 = vadd.f32 %v1801, %v1802
  %v1804 = vsel %vm86, %v1754, 0.0
  %v1805 = vsel %vm86, %v1756, 0.0
  %v1806 = vadd.f32 %v1804, %v1805
  %v1807 = vsel %vm86, %v1758, 0.0
  %v1808 = vadd.f32 %v1806, %v1807
  %v1809 = vsel %vm86, %v1760, 0.0
  %v1810 = vadd.f32 %v1808, %v1809
  %v1811 = vsel %vm86, %v1761, 0.0
  %v1812 = vsel %vm86, %v1763, 0.0
  %v1813 = vadd.f32 %v1811, %v1812
  %v1814 = vsel %vm86, %v1765, 0.0
  %v1815 = vadd.f32 %v1813, %v1814
  %v1816 = vsel %vm86, %v1767, 0.0
  %v1817 = vadd.f32 %v1815, %v1816
  %v1818 = vsel %vm86, %v1762, 0.0
  %v1819 = vsel %vm86, %v1764, 0.0
  %v1820 = vadd.f32 %v1818, %v1819
  %v1821 = vsel %vm86, %v1766, 0.0
  %v1822 = vadd.f32 %v1820, %v1821
  %v1823 = vsel %vm86, %v1768, 0.0
  %v1824 = vadd.f32 %v1822, %v1823
  %v1825 = vsel %vm86, %v1650, 0.0
  %v1826 = vsel %vm86, %v1654, 0.0
  %v1827 = vadd.f32 %v1825, %v1826
  %v1828 = vsel %vm86, %v1658, 0.0
  %v1829 = vadd.f32 %v1827, %v1828
  %v1830 = vsel %vm86, %v1662, 0.0
  %v1831 = vadd.f32 %v1829, %v1830
  %v1832 = vsel %vm86, %v1652, 0.0
  %v1833 = vsel %vm86, %v1656, 0.0
  %v1834 = vadd.f32 %v1832, %v1833
  %v1835 = vsel %vm86, %v1660, 0.0
  %v1836 = vadd.f32 %v1834, %v1835
  %v1837 = vsel %vm86, %v1664, 0.0
  %v1838 = vadd.f32 %v1836, %v1837
  %v1839 = vsel %vm86, %v1666, 0.0
  %v1840 = vsel %vm86, %v1670, 0.0
  %v1841 = vadd.f32 %v1839, %v1840
  %v1842 = vsel %vm86, %v1674, 0.0
  %v1843 = vadd.f32 %v1841, %v1842
  %v1844 = vsel %vm86, %v1678, 0.0
  %v1845 = vadd.f32 %v1843, %v1844
  %v1846 = vsel %vm86, %v1668, 0.0
  %v1847 = vsel %vm86, %v1672, 0.0
  %v1848 = vadd.f32 %v1846, %v1847
  %v1849 = vsel %vm86, %v1676, 0.0
  %v1850 = vadd.f32 %v1848, %v1849
  %v1851 = vsel %vm86, %v1680, 0.0
  %v1852 = vadd.f32 %v1850, %v1851
  %v1853 = vsel %vm86, %v1682, 0.0
  %v1854 = vsel %vm86, %v1686, 0.0
  %v1855 = vadd.f32 %v1853, %v1854
  %v1856 = vsel %vm86, %v1690, 0.0
  %v1857 = vadd.f32 %v1855, %v1856
  %v1858 = vsel %vm86, %v1694, 0.0
  %v1859 = vadd.f32 %v1857, %v1858
  %v1860 = vsel %vm86, %v1684, 0.0
  %v1861 = vsel %vm86, %v1688, 0.0
  %v1862 = vadd.f32 %v1860, %v1861
  %v1863 = vsel %vm86, %v1692, 0.0
  %v1864 = vadd.f32 %v1862, %v1863
  %v1865 = vsel %vm86, %v1696, 0.0
  %v1866 = vadd.f32 %v1864, %v1865
  %v1867 = vsel %vm86, %v1698, 0.0
  %v1868 = vsel %vm86, %v1702, 0.0
  %v1869 = vadd.f32 %v1867, %v1868
  %v1870 = vsel %vm86, %v1706, 0.0
  %v1871 = vadd.f32 %v1869, %v1870
  %v1872 = vsel %vm86, %v1710, 0.0
  %v1873 = vadd.f32 %v1871, %v1872
  %v1874 = vsel %vm86, %v1700, 0.0
  %v1875 = vsel %vm86, %v1704, 0.0
  %v1876 = vadd.f32 %v1874, %v1875
  %v1877 = vsel %vm86, %v1708, 0.0
  %v1878 = vadd.f32 %v1876, %v1877
  %v1879 = vsel %vm86, %v1712, 0.0
  %v1880 = vadd.f32 %v1878, %v1879
  %v1881 = vrcp.pop %v1831
  %v1882 = vrcp.pop %v1838
  %v1883 = vrcp.pop %v1845
  %v1884 = vrcp.pop %v1852
  %v1885 = vrcp.pop %v1859
  %v1886 = vrcp.pop %v1866
  %v1887 = vrcp.pop %v1873
  %v1888 = vrcp.pop %v1880
  %v1889 = vmul.f32 %v1775, %v1881
  %v1890 = vmul.f32 %v1782, %v1882
  %v1891 = vmul.f32 %v1789, %v1883
  %v1892 = vmul.f32 %v1796, %v1884
  %v1893 = vmul.f32 %v1803, %v1885
  %v1894 = vmul.f32 %v1810, %v1886
  %v1895 = vmul.f32 %v1817, %v1887
  %v1896 = vmul.f32 %v1824, %v1888
  %v1898 = vsel %vm86, %v1889, 0
  %v1901 = vsel %vm86, %v1890, 0
  %v1904 = vsel %vm86, %v1891, 0
  %v1907 = vsel %vm86, %v1892, 0
  %v1910 = vsel %vm86, %v1893, 0
  %v1913 = vsel %vm86, %v1894, 0
  %v1916 = vsel %vm86, %v1895, 0
  %v1919 = vsel %vm86, %v1896, 0
  %v1922 = vsel %vm86, %v1366, 0
  %1924 = vmatpush.xpose.msra.mxu0 0.0
  %1925 = vmatpush.xpose.msra.mxu0 0.0
  %1926 = vmatpush.xpose.msra.mxu0 0.0
  %1927 = vmatpush.xpose.msra.mxu0 0.0
  %1928 = vmatpush.xpose.msra.mxu0 0.0
  %1929 = vmatpush.xpose.msra.mxu0 0.0
  %1930 = vmatpush.xpose.msra.mxu0 0.0
  %1931 = vmatpush.xpose.msra.mxu0 0.0
  %1932 = vmatpush.xpose.msra.mxu0 0.0
  %1933 = vmatpush.xpose.msra.mxu0 0.0
  %1934 = vmatpush.xpose.msra.mxu0 0.0
  %1935 = vmatpush.xpose.msra.mxu0 0.0
  %1936 = vmatpush.xpose.msra.mxu0 0.0
  %1937 = vmatpush.xpose.msra.mxu0 0.0
  %1938 = vmatpush.xpose.msra.mxu0 0.0
  %1939 = vmatpush.xpose.msra.mxu0 %v1922
  %1940 = vmatmul.f32.gmra.mxu0 %v1898
  %v1941 = vpop.f32.mrf.mxu0
  %v1942 = vadd.f32 0.0, %v1941
  %1943 = vmatmul.f32.gmra.mxu0 %v1901
  %v1944 = vpop.f32.mrf.mxu0
  %v1945 = vadd.f32 0.0, %v1944
  %1946 = vmatmul.f32.gmra.mxu0 %v1904
  %v1947 = vpop.f32.mrf.mxu0
  %v1948 = vadd.f32 0.0, %v1947
  %1949 = vmatmul.f32.gmra.mxu0 %v1907
  %v1950 = vpop.f32.mrf.mxu0
  %v1951 = vadd.f32 0.0, %v1950
  %1952 = vmatmul.f32.gmra.mxu0 %v1910
  %v1953 = vpop.f32.mrf.mxu0
  %v1954 = vadd.f32 0.0, %v1953
  %1955 = vmatmul.f32.gmra.mxu0 %v1913
  %v1956 = vpop.f32.mrf.mxu0
  %v1957 = vadd.f32 0.0, %v1956
  %1958 = vmatmul.f32.gmra.mxu0 %v1916
  %v1959 = vpop.f32.mrf.mxu0
  %v1960 = vadd.f32 0.0, %v1959
  %1961 = vmatmul.f32.gmra.mxu0 %v1919
  %v1962 = vpop.f32.mrf.mxu0
  %v1963 = vadd.f32 0.0, %v1962
  %1964 = vdwg.mxu0
  %v1966 = vperm.slane %v1367, 0
  %v1968 = vadd.f32 %v1942, %v1966
  %v1969 = vadd.f32 %v1945, %v1966
  %v1970 = vadd.f32 %v1948, %v1966
  %v1971 = vadd.f32 %v1951, %v1966
  %v1972 = vadd.f32 %v1954, %v1966
  %v1973 = vadd.f32 %v1957, %v1966
  %v1974 = vadd.f32 %v1960, %v1966
  %v1975 = vadd.f32 %v1963, %v1966
  %v1976 = vadd.f32 %v1968, %v1353
  %v1977 = vadd.f32 %v1969, %v1354
  %v1978 = vadd.f32 %v1970, %v1355
  %v1979 = vadd.f32 %v1971, %v1356
  %v1980 = vadd.f32 %v1972, %v1357
  %v1981 = vadd.f32 %v1973, %v1358
  %v1982 = vadd.f32 %v1974, %v1359
  %v1983 = vadd.f32 %v1975, %v1360
  %v1985 = vsel %vm86, %v1976, 0
  %v1988 = vsel %vm86, %v1977, 0
  %v1991 = vsel %vm86, %v1978, 0
  %v1994 = vsel %vm86, %v1979, 0
  %v1997 = vsel %vm86, %v1980, 0
  %v2000 = vsel %vm86, %v1981, 0
  %v2003 = vsel %vm86, %v1982, 0
  %v2006 = vsel %vm86, %v1983, 0
  %v2009 = vsel %vm86, %v1368, 0
  %2011 = vmatpush.xpose.msra.mxu0 0.0
  %2012 = vmatpush.xpose.msra.mxu0 0.0
  %2013 = vmatpush.xpose.msra.mxu0 0.0
  %2014 = vmatpush.xpose.msra.mxu0 0.0
  %2015 = vmatpush.xpose.msra.mxu0 0.0
  %2016 = vmatpush.xpose.msra.mxu0 0.0
  %2017 = vmatpush.xpose.msra.mxu0 0.0
  %2018 = vmatpush.xpose.msra.mxu0 0.0
  %2019 = vmatpush.xpose.msra.mxu0 0.0
  %2020 = vmatpush.xpose.msra.mxu0 0.0
  %2021 = vmatpush.xpose.msra.mxu0 0.0
  %2022 = vmatpush.xpose.msra.mxu0 0.0
  %2023 = vmatpush.xpose.msra.mxu0 0.0
  %2024 = vmatpush.xpose.msra.mxu0 0.0
  %2025 = vmatpush.xpose.msra.mxu0 0.0
  %2026 = vmatpush.xpose.msra.mxu0 %v2009
  %2027 = vmatmul.f32.gmra.mxu0 %v1985
  %v2028 = vpop.f32.mrf.mxu0
  %v2029 = vadd.f32 0.0, %v2028
  %2030 = vmatmul.f32.gmra.mxu0 %v1988
  %v2031 = vpop.f32.mrf.mxu0
  %v2032 = vadd.f32 0.0, %v2031
  %2033 = vmatmul.f32.gmra.mxu0 %v1991
  %v2034 = vpop.f32.mrf.mxu0
  %v2035 = vadd.f32 0.0, %v2034
  %2036 = vmatmul.f32.gmra.mxu0 %v1994
  %v2037 = vpop.f32.mrf.mxu0
  %v2038 = vadd.f32 0.0, %v2037
  %2039 = vmatmul.f32.gmra.mxu0 %v1997
  %v2040 = vpop.f32.mrf.mxu0
  %v2041 = vadd.f32 0.0, %v2040
  %2042 = vmatmul.f32.gmra.mxu0 %v2000
  %v2043 = vpop.f32.mrf.mxu0
  %v2044 = vadd.f32 0.0, %v2043
  %2045 = vmatmul.f32.gmra.mxu0 %v2003
  %v2046 = vpop.f32.mrf.mxu0
  %v2047 = vadd.f32 0.0, %v2046
  %2048 = vmatmul.f32.gmra.mxu0 %v2006
  %v2049 = vpop.f32.mrf.mxu0
  %v2050 = vadd.f32 0.0, %v2049
  %2051 = vdwg.mxu0
  %v2053 = vperm.slane %v1369, 0
  %v2055 = vadd.f32 %v2029, %v2053
  %v2056 = vadd.f32 %v2032, %v2053
  %v2057 = vadd.f32 %v2035, %v2053
  %v2058 = vadd.f32 %v2038, %v2053
  %v2059 = vadd.f32 %v2041, %v2053
  %v2060 = vadd.f32 %v2044, %v2053
  %v2061 = vadd.f32 %v2047, %v2053
  %v2062 = vadd.f32 %v2050, %v2053
  %2063 = vst.msk [vmem:[%s20] sm:$0xff] %vm86, %v2055
  %2064 = vst.msk [vmem:[%s20 + $0x8] sm:$0xff] %vm86, %v2056
  %2065 = vst.msk [vmem:[%s20 + $0x10] sm:$0xff] %vm86, %v2057
  %2066 = vst.msk [vmem:[%s20 + $0x18] sm:$0xff] %vm86, %v2058
  %2067 = vst.msk [vmem:[%s20 + $0x20] sm:$0xff] %vm86, %v2059
  %2068 = vst.msk [vmem:[%s20 + $0x28] sm:$0xff] %vm86, %v2060
  %2069 = vst.msk [vmem:[%s20 + $0x30] sm:$0xff] %vm86, %v2061
  %2070 = vst.msk [vmem:[%s20 + $0x38] sm:$0xff] %vm86, %v2062
  // Predicated region
  $region82: #{tpu_custom_call.1} parent=0 // pred_check
    _
  $region83: #{tpu_custom_call.1} parent=0 // pred_check_branch
    %2072 = sbr.rel (0) target = $region85
  $region84: #{tpu_custom_call.1} parent=0 // pred_region
    _
  $region85: #{tpu_custom_call.1} parent=0 // pred_fallthru
    _
  // Predicated region
  $region86: #{tpu_custom_call.1} parent=0 // pred_check
    _
  $region87: #{tpu_custom_call.1} parent=0 // pred_check_branch
    %2074 = sbr.rel (0) target = $region89
  $region88: #{tpu_custom_call.1} parent=0 // pred_region
    _
  $region89: #{tpu_custom_call.1} parent=0 // pred_fallthru
    _

</llo_original>
